<compile_context>
chip_gen: v6e
topology: v6e:2x2x1
jax: 0.10.0
libtpu: 0.0.40
codegen_flags: <defaults>
</compile_context>

<pallas_src>
import functools

import jax
import jax.numpy as jnp
from jax.experimental import pallas as pl
from jax.experimental.pallas import tpu as pltpu


def _round_up(v, m):
    return ((v + m - 1) // m) * m


def _double_conv_kernel(x_ref, w1_ref, b1_ref, w2_ref, b2_ref, mask_ref,
                        out_ref, *, w_pad, tile_len, mxu_dtype):
    # x_ref:    (Cin_p,  T)           channels on sublanes; T = imgs_per_tile *
    #                                 round_up((H+2)*(W+2), 128) lanes
    # w1_ref:   (3, Cmid_p, 3*Cin_p)  conv1 weights (BN1 scale folded), per-ky
    # b1_ref:   (Cmid_p, 1)           BN1 bias
    # w2_ref:   (3, Cout_p, 3*Cmid_p) conv2 weights (BN2 scale folded), per-ky
    # b2_ref:   (Cout_p, 1)           BN2 bias
    # mask_ref: (1, T)                1.0 on interior pixels of each image block
    # out_ref:  (Cout_p, T)

    def conv(a, w_ref):
        # im2col via lane rotations (XLU), grouped per kernel row: three
        # K=3*C_in MXU matmuls accumulated (3x smaller scratch / store burst
        # than a single 9-tap concat).  Center tap (shift 0) skips its roll.
        # Rolls wrap within the tile; interior taps never cross an image's
        # 128-padded block, so wrapped lanes only feed masked/discarded lanes.
        acc = None
        for ky in range(3):
            taps = []
            for kx in range(3):
                o = (ky - 1) * w_pad + (kx - 1)
                taps.append(a if o == 0
                            else pltpu.roll(a, shift=(-o) % tile_len, axis=1))
            group = jnp.concatenate(taps, axis=0).astype(mxu_dtype)
            part = jnp.dot(w_ref[ky], group,
                           preferred_element_type=jnp.float32)
            acc = part if acc is None else acc + part
        return acc

    # conv1 + BN1 + ReLU; the mask restores exact zeros on the 1-pixel border
    # (and the per-image lane padding) so it acts as conv2's zero padding.
    mid = jnp.maximum(conv(x_ref[...], w1_ref) + b1_ref[...], 0.0) * mask_ref[...]
    # conv2 + BN2 + (Dropout2d == identity in eval) + ReLU
    out = jnp.maximum(conv(mid, w2_ref) + b2_ref[...], 0.0)
    out_ref[...] = out.astype(out_ref.dtype)


def ref_double_conv(x_nchw, params, *, eps=1e-5, mxu_dtype=jnp.float32,
                    images_per_tile=None, vmem_budget_bytes=24 << 20):
    """x_nchw: (N, Cin, H, W) f32 -> (N, Cout, H, W) f32 (eval-mode DoubleConv)."""
    w1, g1, be1, m1, v1, w2, g2, be2, m2, v2 = params
    N, Cin, H, W = x_nchw.shape
    Cmid = w1.shape[0]
    Cout = w2.shape[0]

    Cin_p = _round_up(Cin, 8)
    Cmid_p = _round_up(Cmid, 8)
    Cout_p = _round_up(Cout, 8)

    Hp, Wp = H + 2, W + 2
    npad = Hp * Wp
    block = _round_up(npad, 128)            # per-image lane block, vreg aligned
    op_bytes = jnp.dtype(mxu_dtype).itemsize

    # ---- VMEM-budgeted tile choice (whole images per tile) -------------------
    cmax = max(Cin_p, Cmid_p)
    per_lane = (2 * Cin_p * 4               # x tile (double-buffered)
                + 2 * Cout_p * 4            # out tile (double-buffered)
                + 2 * 4                     # mask tile (double-buffered)
                + Cmid_p * 4                # mid activations
                + Cout_p * 4                # f32 accumulator
                + 4 * cmax * op_bytes)      # per-ky im2col group + rolled tap
    if images_per_tile is None:
        lanes = max(block, vmem_budget_bytes // per_lane)
        images_per_tile = max(1, min(N, lanes // block))
    n_tiles = (N + images_per_tile - 1) // images_per_tile
    N_pad = n_tiles * images_per_tile
    tile_len = images_per_tile * block
    L = n_tiles * tile_len

    # ---- input: NCHW -> (Cin_p, L), whole-image 128-padded lane blocks -------
    x = x_nchw.astype(jnp.float32)
    x = jnp.pad(x, ((0, 0), (0, Cin_p - Cin), (1, 1), (1, 1)))
    x = jnp.transpose(x, (1, 0, 2, 3)).reshape(Cin_p, N, npad)
    x = jnp.pad(x, ((0, 0), (0, N_pad - N), (0, block - npad)))
    x = x.reshape(Cin_p, L)

    # ---- fold BN running stats: scale into the weights, bias kept separate ---
    s1 = g1 / jnp.sqrt(v1 + eps)
    s2 = g2 / jnp.sqrt(v2 + eps)
    b1 = (be1 - m1 * s1).astype(jnp.float32)
    b2 = (be2 - m2 * s2).astype(jnp.float32)

    def weight_mat(w_oihw, scale, co, ci, co_p, ci_p):
        w = (w_oihw * scale[:, None, None, None]).astype(jnp.float32)
        w = jnp.pad(w, ((0, co_p - co), (0, ci_p - ci), (0, 0), (0, 0)))
        # OIHW -> (ky, O, kx, I) -> (3, O, 3*I); per-ky column = kx*ci_p + ci,
        # matching the kernel's per-ky tap concat order.
        w = jnp.transpose(w, (2, 0, 3, 1)).reshape(3, co_p, 3 * ci_p)
        return w.astype(mxu_dtype)          # pre-cast MXU operand in wrapper

    w1m = weight_mat(w1, s1, Cmid, Cin, Cmid_p, Cin_p)
    w2m = weight_mat(w2, s2, Cout, Cmid, Cout_p, Cmid_p)
    b1c = jnp.pad(b1, (0, Cmid_p - Cmid)).reshape(Cmid_p, 1)
    b2c = jnp.pad(b2, (0, Cout_p - Cout)).reshape(Cout_p, 1)

    # interior-pixel mask for ONE lane tile (identical for every tile -> stays
    # VMEM-resident via a constant index_map)
    yy = jnp.arange(Hp)
    xx = jnp.arange(Wp)
    interior = ((yy[:, None] >= 1) & (yy[:, None] <= H) &
                (xx[None, :] >= 1) & (xx[None, :] <= W))
    mask = jnp.pad(interior.reshape(npad).astype(jnp.float32),
                   (0, block - npad))
    mask = jnp.tile(mask, images_per_tile).reshape(1, tile_len)

    kernel = functools.partial(_double_conv_kernel, w_pad=Wp,
                               tile_len=tile_len, mxu_dtype=mxu_dtype)

    # raise the scoped-VMEM limit only when the tile actually needs it
    est_vmem = per_lane * tile_len + 2 * ((w1m.size + w2m.size) * op_bytes
                                          + (Cmid_p + Cout_p) * 4)
    vmem_limit = int(min(2 * est_vmem, 48 << 20)) if est_vmem > (12 << 20) else None

    out_full = pl.pallas_call(
        kernel,
        out_shape=jax.ShapeDtypeStruct((Cout_p, L), jnp.float32),
        grid_spec=pltpu.PrefetchScalarGridSpec(
            num_scalar_prefetch=0,
            grid=(n_tiles,),
            in_specs=[
                pl.BlockSpec((Cin_p, tile_len), lambda i: (0, i)),
                pl.BlockSpec((3, Cmid_p, 3 * Cin_p), lambda i: (0, 0, 0)),
                pl.BlockSpec((Cmid_p, 1), lambda i: (0, 0)),
                pl.BlockSpec((3, Cout_p, 3 * Cmid_p), lambda i: (0, 0, 0)),
                pl.BlockSpec((Cout_p, 1), lambda i: (0, 0)),
                pl.BlockSpec((1, tile_len), lambda i: (0, 0)),
            ],
            out_specs=pl.BlockSpec((Cout_p, tile_len), lambda i: (0, i)),
        ),
        compiler_params=pltpu.CompilerParams(
            dimension_semantics=("parallel",),      # megacore on v7x
            vmem_limit_bytes=vmem_limit),
    )(x, w1m, b1c, w2m, b2c, mask)

    # (Cout_p, L) -> (N, Cout, H, W): slice valid channels/images/lanes
    out = out_full.reshape(Cout_p, N_pad, block)[:Cout, :N, :npad]
    out = out.reshape(Cout, N, Hp, Wp)[:, :, 1:H + 1, 1:W + 1]
    return jnp.transpose(out, (1, 0, 2, 3))


def _jax_reference(x_nchw, params, eps=1e-5):
    """Plain-JAX reference (lax conv) for correctness check."""
    w1, g1, be1, m1, v1, w2, g2, be2, m2, v2 = params
    x = jnp.transpose(x_nchw, (0, 2, 3, 1))

    def conv(x_nhwc, w_oihw):
        w_hwio = jnp.transpose(w_oihw, (2, 3, 1, 0))
        return jax.lax.conv_general_dilated(
            x_nhwc, w_hwio, window_strides=(1, 1), padding="SAME",
            dimension_numbers=("NHWC", "HWIO", "NHWC"))

    def bn(y, g, b, m, v):
        return (y - m) / jnp.sqrt(v + eps) * g + b

    h = jax.nn.relu(bn(conv(x, w1), g1, be1, m1, v1))
    o = jax.nn.relu(bn(conv(h, w2), g2, be2, m2, v2))
    return jnp.transpose(o, (0, 3, 1, 2))


if __name__ == "__main__":
    key = jax.random.PRNGKey(0)
    N, Cin, H, W = 2, 4, 16, 16
    Cmid = Cout = 8   # mid_channels defaults to out_channels

    ks = jax.random.split(key, 8)
    x = jax.random.normal(ks[0], (N, Cin, H, W), jnp.float32)

    # conv weights in PyTorch OIHW layout, no bias (bias=False in the module)
    w1 = jax.random.normal(ks[1], (Cmid, Cin, 3, 3), jnp.float32) * 0.1
    w2 = jax.random.normal(ks[2], (Cout, Cmid, 3, 3), jnp.float32) * 0.1

    # BatchNorm parameters + running stats (deterministic)
    g1 = 1.0 + 0.1 * jax.random.normal(ks[3], (Cmid,), jnp.float32)
    be1 = 0.1 * jax.random.normal(ks[4], (Cmid,), jnp.float32)
    m1 = 0.05 * jax.random.normal(ks[5], (Cmid,), jnp.float32)
    v1 = 1.0 + 0.1 * jax.random.uniform(ks[6], (Cmid,), jnp.float32)
    g2 = jnp.linspace(0.9, 1.1, Cout, dtype=jnp.float32)
    be2 = jnp.linspace(-0.1, 0.1, Cout, dtype=jnp.float32)
    m2 = jnp.linspace(-0.05, 0.05, Cout, dtype=jnp.float32)
    v2 = jnp.linspace(1.0, 1.2, Cout, dtype=jnp.float32)

    params = (w1, g1, be1, m1, v1, w2, g2, be2, m2, v2)

    ref = jax.block_until_ready(_jax_reference(x, params))

    # f32 MXU operands, one image per lane tile -> grid=(2,): exercises the
    # double-buffered / megacore-parallel tiled path.
    run_f32 = jax.jit(functools.partial(ref_double_conv, images_per_tile=1))
    out = jax.block_until_ready(run_f32(x, params))
    assert out.shape == (N, Cout, H, W), out.shape
    err = float(jnp.max(jnp.abs(out - ref)))
    assert jnp.allclose(out, ref, atol=2e-3, rtol=2e-3), err

    # bf16 MXU operands (v6e/v7x fast MXU path), f32 accumulation; auto tile
    # choice packs both images into one tile.  Looser tolerance for bf16.
    run_bf16 = jax.jit(functools.partial(ref_double_conv,
                                         mxu_dtype=jnp.bfloat16))
    out_bf16 = jax.block_until_ready(run_bf16(x, params))
    err_bf16 = float(jnp.max(jnp.abs(out_bf16 - ref)))
    assert jnp.allclose(out_bf16, ref, atol=2e-2, rtol=2e-2), err_bf16

    print("KERNEL_OK")
</pallas_src>

<mosaic_0001>
module attributes {stable_mosaic.version = 11 : i64} {
  func.func @_double_conv_kernel(%arg0: i32, %arg1: memref<8x384xf32, #tpu.memory_space<vmem>>, %arg2: memref<3x8x24xf32, #tpu.memory_space<vmem>>, %arg3: memref<8x1xf32, #tpu.memory_space<vmem>>, %arg4: memref<3x8x24xf32, #tpu.memory_space<vmem>>, %arg5: memref<8x1xf32, #tpu.memory_space<vmem>>, %arg6: memref<1x384xf32, #tpu.memory_space<vmem>>, %arg7: memref<8x384xf32, #tpu.memory_space<vmem>>) attributes {dimension_semantics = [#tpu.dimension_semantics<parallel>], iteration_bounds = array<i64: 2>, scalar_prefetch = 0 : i64, scratch_operands = 0 : i64, tpu.core_type = #tpu.core_type<tc>, window_params = [{transform_indices = @transform_0, window_bounds = array<i64: 8, 384>}, {pipeline_mode = #tpu.pipeline_mode<synchronous>, transform_indices = @transform_1, window_bounds = array<i64: 3, 8, 24>}, {pipeline_mode = #tpu.pipeline_mode<synchronous>, transform_indices = @transform_2, window_bounds = array<i64: 8, 1>}, {pipeline_mode = #tpu.pipeline_mode<synchronous>, transform_indices = @transform_3, window_bounds = array<i64: 3, 8, 24>}, {pipeline_mode = #tpu.pipeline_mode<synchronous>, transform_indices = @transform_4, window_bounds = array<i64: 8, 1>}, {pipeline_mode = #tpu.pipeline_mode<synchronous>, transform_indices = @transform_5, window_bounds = array<i64: 1, 384>}, {transform_indices = @transform_6, window_bounds = array<i64: 8, 384>}]} {
    %c0 = arith.constant 0 : index
    %c0_0 = arith.constant 0 : index
    %0 = vector.load %arg1[%c0, %c0_0] : memref<8x384xf32, #tpu.memory_space<vmem>>, vector<8x384xf32>
    %c19_i32 = arith.constant 19 : i32
    %1 = tpu.dynamic_rotate %0 by %c19_i32 dim 1 : vector<8x384xf32>, i32 -> vector<8x384xf32>
    %c18_i32 = arith.constant 18 : i32
    %2 = tpu.dynamic_rotate %0 by %c18_i32 dim 1 : vector<8x384xf32>, i32 -> vector<8x384xf32>
    %c17_i32 = arith.constant 17 : i32
    %3 = tpu.dynamic_rotate %0 by %c17_i32 dim 1 : vector<8x384xf32>, i32 -> vector<8x384xf32>
    %4 = tpu.concatenate %1, %2, %3 in 0 : vector<8x384xf32>, vector<8x384xf32>, vector<8x384xf32> -> vector<24x384xf32>
    %c0_1 = arith.constant 0 : index
    %c0_2 = arith.constant 0 : index
    %c0_3 = arith.constant 0 : index
    %5 = vector.load %arg2[%c0_1, %c0_2, %c0_3] : memref<3x8x24xf32, #tpu.memory_space<vmem>>, vector<1x8x24xf32>
    %6 = vector.shape_cast %5 : vector<1x8x24xf32> to vector<8x24xf32>
    %cst = arith.constant dense<0.000000e+00> : vector<8x384xf32>
    %7 = tpu.matmul %6, %4, %cst {dimension_numbers = #tpu.dot_dimension_numbers<[1], [0], [0], [1], [0, 0, 1, 1], [], []>} : vector<8x24xf32>, vector<24x384xf32>, vector<8x384xf32> -> vector<8x384xf32>
    %c1_i32 = arith.constant 1 : i32
    %8 = tpu.dynamic_rotate %0 by %c1_i32 dim 1 : vector<8x384xf32>, i32 -> vector<8x384xf32>
    %c383_i32 = arith.constant 383 : i32
    %9 = tpu.dynamic_rotate %0 by %c383_i32 dim 1 : vector<8x384xf32>, i32 -> vector<8x384xf32>
    %10 = tpu.concatenate %8, %0, %9 in 0 : vector<8x384xf32>, vector<8x384xf32>, vector<8x384xf32> -> vector<24x384xf32>
    %c1 = arith.constant 1 : index
    %c0_4 = arith.constant 0 : index
    %c0_5 = arith.constant 0 : index
    %11 = vector.load %arg2[%c1, %c0_4, %c0_5] : memref<3x8x24xf32, #tpu.memory_space<vmem>>, vector<1x8x24xf32>
    %12 = vector.shape_cast %11 : vector<1x8x24xf32> to vector<8x24xf32>
    %cst_6 = arith.constant dense<0.000000e+00> : vector<8x384xf32>
    %13 = tpu.matmul %12, %10, %cst_6 {dimension_numbers = #tpu.dot_dimension_numbers<[1], [0], [0], [1], [0, 0, 1, 1], [], []>} : vector<8x24xf32>, vector<24x384xf32>, vector<8x384xf32> -> vector<8x384xf32>
    %14 = arith.addf %7, %13 : vector<8x384xf32>
    %c367_i32 = arith.constant 367 : i32
    %15 = tpu.dynamic_rotate %0 by %c367_i32 dim 1 : vector<8x384xf32>, i32 -> vector<8x384xf32>
    %c366_i32 = arith.constant 366 : i32
    %16 = tpu.dynamic_rotate %0 by %c366_i32 dim 1 : vector<8x384xf32>, i32 -> vector<8x384xf32>
    %c365_i32 = arith.constant 365 : i32
    %17 = tpu.dynamic_rotate %0 by %c365_i32 dim 1 : vector<8x384xf32>, i32 -> vector<8x384xf32>
    %18 = tpu.concatenate %15, %16, %17 in 0 : vector<8x384xf32>, vector<8x384xf32>, vector<8x384xf32> -> vector<24x384xf32>
    %c2 = arith.constant 2 : index
    %c0_7 = arith.constant 0 : index
    %c0_8 = arith.constant 0 : index
    %19 = vector.load %arg2[%c2, %c0_7, %c0_8] : memref<3x8x24xf32, #tpu.memory_space<vmem>>, vector<1x8x24xf32>
    %20 = vector.shape_cast %19 : vector<1x8x24xf32> to vector<8x24xf32>
    %cst_9 = arith.constant dense<0.000000e+00> : vector<8x384xf32>
    %21 = tpu.matmul %20, %18, %cst_9 {dimension_numbers = #tpu.dot_dimension_numbers<[1], [0], [0], [1], [0, 0, 1, 1], [], []>} : vector<8x24xf32>, vector<24x384xf32>, vector<8x384xf32> -> vector<8x384xf32>
    %22 = arith.addf %14, %21 : vector<8x384xf32>
    %c0_10 = arith.constant 0 : index
    %c0_11 = arith.constant 0 : index
    %23 = vector.load %arg3[%c0_10, %c0_11] : memref<8x1xf32, #tpu.memory_space<vmem>>, vector<8x1xf32>
    %24 = vector.broadcast %23 : vector<8x1xf32> to vector<8x384xf32>
    %25 = arith.addf %22, %24 : vector<8x384xf32>
    %cst_12 = arith.constant 0.000000e+00 : f32
    %26 = vector.broadcast %cst_12 : f32 to vector<8x384xf32>
    %27 = arith.maximumf %25, %26 : vector<8x384xf32>
    %c0_13 = arith.constant 0 : index
    %c0_14 = arith.constant 0 : index
    %28 = vector.load %arg6[%c0_13, %c0_14] : memref<1x384xf32, #tpu.memory_space<vmem>>, vector<1x384xf32>
    %29 = vector.broadcast %28 : vector<1x384xf32> to vector<8x384xf32>
    %30 = arith.mulf %27, %29 : vector<8x384xf32>
    %c19_i32_15 = arith.constant 19 : i32
    %31 = tpu.dynamic_rotate %30 by %c19_i32_15 dim 1 : vector<8x384xf32>, i32 -> vector<8x384xf32>
    %c18_i32_16 = arith.constant 18 : i32
    %32 = tpu.dynamic_rotate %30 by %c18_i32_16 dim 1 : vector<8x384xf32>, i32 -> vector<8x384xf32>
    %c17_i32_17 = arith.constant 17 : i32
    %33 = tpu.dynamic_rotate %30 by %c17_i32_17 dim 1 : vector<8x384xf32>, i32 -> vector<8x384xf32>
    %34 = tpu.concatenate %31, %32, %33 in 0 : vector<8x384xf32>, vector<8x384xf32>, vector<8x384xf32> -> vector<24x384xf32>
    %c0_18 = arith.constant 0 : index
    %c0_19 = arith.constant 0 : index
    %c0_20 = arith.constant 0 : index
    %35 = vector.load %arg4[%c0_18, %c0_19, %c0_20] : memref<3x8x24xf32, #tpu.memory_space<vmem>>, vector<1x8x24xf32>
    %36 = vector.shape_cast %35 : vector<1x8x24xf32> to vector<8x24xf32>
    %cst_21 = arith.constant dense<0.000000e+00> : vector<8x384xf32>
    %37 = tpu.matmul %36, %34, %cst_21 {dimension_numbers = #tpu.dot_dimension_numbers<[1], [0], [0], [1], [0, 0, 1, 1], [], []>} : vector<8x24xf32>, vector<24x384xf32>, vector<8x384xf32> -> vector<8x384xf32>
    %c1_i32_22 = arith.constant 1 : i32
    %38 = tpu.dynamic_rotate %30 by %c1_i32_22 dim 1 : vector<8x384xf32>, i32 -> vector<8x384xf32>
    %c383_i32_23 = arith.constant 383 : i32
    %39 = tpu.dynamic_rotate %30 by %c383_i32_23 dim 1 : vector<8x384xf32>, i32 -> vector<8x384xf32>
    %40 = tpu.concatenate %38, %30, %39 in 0 : vector<8x384xf32>, vector<8x384xf32>, vector<8x384xf32> -> vector<24x384xf32>
    %c1_24 = arith.constant 1 : index
    %c0_25 = arith.constant 0 : index
    %c0_26 = arith.constant 0 : index
    %41 = vector.load %arg4[%c1_24, %c0_25, %c0_26] : memref<3x8x24xf32, #tpu.memory_space<vmem>>, vector<1x8x24xf32>
    %42 = vector.shape_cast %41 : vector<1x8x24xf32> to vector<8x24xf32>
    %cst_27 = arith.constant dense<0.000000e+00> : vector<8x384xf32>
    %43 = tpu.matmul %42, %40, %cst_27 {dimension_numbers = #tpu.dot_dimension_numbers<[1], [0], [0], [1], [0, 0, 1, 1], [], []>} : vector<8x24xf32>, vector<24x384xf32>, vector<8x384xf32> -> vector<8x384xf32>
    %44 = arith.addf %37, %43 : vector<8x384xf32>
    %c367_i32_28 = arith.constant 367 : i32
    %45 = tpu.dynamic_rotate %30 by %c367_i32_28 dim 1 : vector<8x384xf32>, i32 -> vector<8x384xf32>
    %c366_i32_29 = arith.constant 366 : i32
    %46 = tpu.dynamic_rotate %30 by %c366_i32_29 dim 1 : vector<8x384xf32>, i32 -> vector<8x384xf32>
    %c365_i32_30 = arith.constant 365 : i32
    %47 = tpu.dynamic_rotate %30 by %c365_i32_30 dim 1 : vector<8x384xf32>, i32 -> vector<8x384xf32>
    %48 = tpu.concatenate %45, %46, %47 in 0 : vector<8x384xf32>, vector<8x384xf32>, vector<8x384xf32> -> vector<24x384xf32>
    %c2_31 = arith.constant 2 : index
    %c0_32 = arith.constant 0 : index
    %c0_33 = arith.constant 0 : index
    %49 = vector.load %arg4[%c2_31, %c0_32, %c0_33] : memref<3x8x24xf32, #tpu.memory_space<vmem>>, vector<1x8x24xf32>
    %50 = vector.shape_cast %49 : vector<1x8x24xf32> to vector<8x24xf32>
    %cst_34 = arith.constant dense<0.000000e+00> : vector<8x384xf32>
    %51 = tpu.matmul %50, %48, %cst_34 {dimension_numbers = #tpu.dot_dimension_numbers<[1], [0], [0], [1], [0, 0, 1, 1], [], []>} : vector<8x24xf32>, vector<24x384xf32>, vector<8x384xf32> -> vector<8x384xf32>
    %52 = arith.addf %44, %51 : vector<8x384xf32>
    %c0_35 = arith.constant 0 : index
    %c0_36 = arith.constant 0 : index
    %53 = vector.load %arg5[%c0_35, %c0_36] : memref<8x1xf32, #tpu.memory_space<vmem>>, vector<8x1xf32>
    %54 = vector.broadcast %53 : vector<8x1xf32> to vector<8x384xf32>
    %55 = arith.addf %52, %54 : vector<8x384xf32>
    %cst_37 = arith.constant 0.000000e+00 : f32
    %56 = vector.broadcast %cst_37 : f32 to vector<8x384xf32>
    %57 = arith.maximumf %55, %56 : vector<8x384xf32>
    %c0_38 = arith.constant 0 : index
    %c0_39 = arith.constant 0 : index
    %58 = vector.load %arg7[%c0_38, %c0_39] : memref<8x384xf32, #tpu.memory_space<vmem>>, vector<8x384xf32>
    tpu.vector_store %arg7[%c0_38, %c0_39], %57 {strides = array<i32>} : memref<8x384xf32, #tpu.memory_space<vmem>>, vector<8x384xf32>,
    return
  }
  func.func @transform_0(%arg0: i32) -> (i32, i32) {
    %c0_i32 = arith.constant 0 : i32
    %c0_i32_0 = arith.constant 0 : i32
    return %c0_i32, %arg0 : i32, i32
  }
  func.func @transform_1(%arg0: i32) -> (i32, i32, i32) {
    %c0_i32 = arith.constant 0 : i32
    %c0_i32_0 = arith.constant 0 : i32
    %c0_i32_1 = arith.constant 0 : i32
    %c0_i32_2 = arith.constant 0 : i32
    return %c0_i32, %c0_i32_0, %c0_i32_1 : i32, i32, i32
  }
  func.func @transform_2(%arg0: i32) -> (i32, i32) {
    %c0_i32 = arith.constant 0 : i32
    %c0_i32_0 = arith.constant 0 : i32
    %c0_i32_1 = arith.constant 0 : i32
    return %c0_i32, %c0_i32_0 : i32, i32
  }
  func.func @transform_3(%arg0: i32) -> (i32, i32, i32) {
    %c0_i32 = arith.constant 0 : i32
    %c0_i32_0 = arith.constant 0 : i32
    %c0_i32_1 = arith.constant 0 : i32
    %c0_i32_2 = arith.constant 0 : i32
    return %c0_i32, %c0_i32_0, %c0_i32_1 : i32, i32, i32
  }
  func.func @transform_4(%arg0: i32) -> (i32, i32) {
    %c0_i32 = arith.constant 0 : i32
    %c0_i32_0 = arith.constant 0 : i32
    %c0_i32_1 = arith.constant 0 : i32
    return %c0_i32, %c0_i32_0 : i32, i32
  }
  func.func @transform_5(%arg0: i32) -> (i32, i32) {
    %c0_i32 = arith.constant 0 : i32
    %c0_i32_0 = arith.constant 0 : i32
    %c0_i32_1 = arith.constant 0 : i32
    return %c0_i32, %c0_i32_0 : i32, i32
  }
  func.func @transform_6(%arg0: i32) -> (i32, i32) {
    %c0_i32 = arith.constant 0 : i32
    %c0_i32_0 = arith.constant 0 : i32
    return %c0_i32, %arg0 : i32, i32
  }
}

</mosaic_0001>

<llo_original>
// kernel: ref_double_conv.1
$region0: #{ref_double_conv.1}
  #allocation0 [shape = 'u32[]', space=smem, size = 0x4, offset = 0x4, fixed_abs, tag = 'smem constant byte address 0x4 - core index']
  #allocation1 [shape = 'u32[144,128]{1,0:T(1,128)}', space=vmem, size = 0x12000, scoped, tag = 'internal scratch']
  %s0 = inlined_call_operand.vmem [shape: f32[8,768], index: 0, kind: input, shape index: {}]
  %s1 = inlined_call_operand.vmem [shape: f32[3,8,24], index: 1, kind: input, shape index: {}]
  %s2 = inlined_call_operand.vmem [shape: f32[8,1], index: 2, kind: input, shape index: {}]
  %s3 = inlined_call_operand.vmem [shape: f32[3,8,24], index: 3, kind: input, shape index: {}]
  %s4 = inlined_call_operand.vmem [shape: f32[8,1], index: 4, kind: input, shape index: {}]
  %s5 = inlined_call_operand.vmem [shape: f32[1,384], index: 5, kind: input, shape index: {}]
  %s6 = inlined_call_operand.vmem [shape: f32[8,768], index: 6, kind: output, shape index: {}]
  %s7 = sld [smem:[#allocation0]]
  $region57: #{ref_double_conv.1} parent=0
    _
  %s9 = ssub.s32 1, %s7
  %s10 = scalar_select 0, %s9, %s7
  loop: start=0, step=1, limit=4
  $region2: #{ref_double_conv.1} parent=0 // loop_pre_header
    _
  $region3: #{ref_double_conv.1} parent=0 // loop_header
    %s12 = sphi 0, %s16
    %p13 = scmp.ge.s32.totalorder %s12, 4
    %s22 = sphi 0, %s24
    %s25 = sphi 0, %s22
    %s26 = sphi 0, %s25
    %s42 = sphi 0, %s26
    %s46 = sphi 0, %s46
    %s48 = sphi 0, %s46
    %s49 = sphi 0, %s48
    %s63 = sphi 0, %s49
    %s67 = sphi 0, %s67
    %s69 = sphi 0, %s67
    %s70 = sphi 0, %s69
    %s84 = sphi 0, %s70
    %s88 = sphi 0, %s88
    %s90 = sphi 0, %s88
    %s91 = sphi 0, %s90
    %s105 = sphi 0, %s91
    %s109 = sphi 0, %s109
    %s111 = sphi 0, %s109
    %s112 = sphi 0, %s111
    %s126 = sphi 0, %s112
    %s130 = sphi 0, %s130
    %s132 = sphi 0, %s130
    %s133 = sphi 0, %s132
    %s147 = sphi 0, %s133
    %s153 = sphi 0, %s155
    %s156 = sphi 0, %s153
    %s157 = sphi 0, %s156
    %s173 = sphi 0, %s157
  $region4: #{ref_double_conv.1} parent=0 // loop_header_branch
    %15 = sbr.rel (%p13) target = $region8
  $region5: #{ref_double_conv.1} parent=0 // loop_body
    %s17 = ssub.s32 %s12, 1
    %s18 = ssub.s32 %s12, 2
    %s19 = sadd.s32 %s12, 1
    %s20 = ssub.s32 %s12, %s19
    %p21 = scmp.eq.s32.totalorder %s20, 0
    %s23 = sadd.s32 %s22, 1
    %s24 = scalar_select %p21, %s22, %s23
    %p27 = pneg %p21
    %p28 = scmp.eq.s32.totalorder %s12, 1
    %p29 = por %p27, %p28
    %p30 = scmp.ne.s32.totalorder %s22, %s25
    %p31 = scmp.eq.s32.totalorder %s12, 0
    %p32 = por %p30, %p31
    %p33 = scmp.ne.s32.totalorder %s22, %s25
    %p34 = scmp.eq.s32.totalorder %s17, 1
    %p35 = por %p33, %p34
    %p36 = scmp.ne.s32.totalorder %s25, %s26
    %p37 = scmp.eq.s32.totalorder %s17, 0
    %p38 = por %p36, %p37
    %p39 = scmp.ne.s32.totalorder %s25, %s26
    %p40 = scmp.eq.s32.totalorder %s18, 1
    %p41 = por %p39, %p40
    %p43 = scmp.ne.s32.totalorder %s26, %s42
    %p44 = scmp.eq.s32.totalorder %s18, 0
    %p45 = por %p43, %p44
    %s47 = sadd.s32 %s46, 1
    %p50 = scmp.eq.s32.totalorder %s12, 1
    %p51 = scmp.ne.s32.totalorder %s46, %s48
    %p52 = scmp.eq.s32.totalorder %s12, 0
    %p53 = por %p51, %p52
    %p54 = scmp.ne.s32.totalorder %s46, %s48
    %p55 = scmp.eq.s32.totalorder %s17, 1
    %p56 = por %p54, %p55
    %p57 = scmp.ne.s32.totalorder %s48, %s49
    %p58 = scmp.eq.s32.totalorder %s17, 0
    %p59 = por %p57, %p58
    %p60 = scmp.ne.s32.totalorder %s48, %s49
    %p61 = scmp.eq.s32.totalorder %s18, 1
    %p62 = por %p60, %p61
    %p64 = scmp.ne.s32.totalorder %s49, %s63
    %p65 = scmp.eq.s32.totalorder %s18, 0
    %p66 = por %p64, %p65
    %s68 = sadd.s32 %s67, 1
    %p71 = scmp.eq.s32.totalorder %s12, 1
    %p72 = scmp.ne.s32.totalorder %s67, %s69
    %p73 = scmp.eq.s32.totalorder %s12, 0
    %p74 = por %p72, %p73
    %p75 = scmp.ne.s32.totalorder %s67, %s69
    %p76 = scmp.eq.s32.totalorder %s17, 1
    %p77 = por %p75, %p76
    %p78 = scmp.ne.s32.totalorder %s69, %s70
    %p79 = scmp.eq.s32.totalorder %s17, 0
    %p80 = por %p78, %p79
    %p81 = scmp.ne.s32.totalorder %s69, %s70
    %p82 = scmp.eq.s32.totalorder %s18, 1
    %p83 = por %p81, %p82
    %p85 = scmp.ne.s32.totalorder %s70, %s84
    %p86 = scmp.eq.s32.totalorder %s18, 0
    %p87 = por %p85, %p86
    %s89 = sadd.s32 %s88, 1
    %p92 = scmp.eq.s32.totalorder %s12, 1
    %p93 = scmp.ne.s32.totalorder %s88, %s90
    %p94 = scmp.eq.s32.totalorder %s12, 0
    %p95 = por %p93, %p94
    %p96 = scmp.ne.s32.totalorder %s88, %s90
    %p97 = scmp.eq.s32.totalorder %s17, 1
    %p98 = por %p96, %p97
    %p99 = scmp.ne.s32.totalorder %s90, %s91
    %p100 = scmp.eq.s32.totalorder %s17, 0
    %p101 = por %p99, %p100
    %p102 = scmp.ne.s32.totalorder %s90, %s91
    %p103 = scmp.eq.s32.totalorder %s18, 1
    %p104 = por %p102, %p103
    %p106 = scmp.ne.s32.totalorder %s91, %s105
    %p107 = scmp.eq.s32.totalorder %s18, 0
    %p108 = por %p106, %p107
    %s110 = sadd.s32 %s109, 1
    %p113 = scmp.eq.s32.totalorder %s12, 1
    %p114 = scmp.ne.s32.totalorder %s109, %s111
    %p115 = scmp.eq.s32.totalorder %s12, 0
    %p116 = por %p114, %p115
    %p117 = scmp.ne.s32.totalorder %s109, %s111
    %p118 = scmp.eq.s32.totalorder %s17, 1
    %p119 = por %p117, %p118
    %p120 = scmp.ne.s32.totalorder %s111, %s112
    %p121 = scmp.eq.s32.totalorder %s17, 0
    %p122 = por %p120, %p121
    %p123 = scmp.ne.s32.totalorder %s111, %s112
    %p124 = scmp.eq.s32.totalorder %s18, 1
    %p125 = por %p123, %p124
    %p127 = scmp.ne.s32.totalorder %s112, %s126
    %p128 = scmp.eq.s32.totalorder %s18, 0
    %p129 = por %p127, %p128
    %s131 = sadd.s32 %s130, 1
    %p134 = scmp.eq.s32.totalorder %s12, 1
    %p135 = scmp.ne.s32.totalorder %s130, %s132
    %p136 = scmp.eq.s32.totalorder %s12, 0
    %p137 = por %p135, %p136
    %p138 = scmp.ne.s32.totalorder %s130, %s132
    %p139 = scmp.eq.s32.totalorder %s17, 1
    %p140 = por %p138, %p139
    %p141 = scmp.ne.s32.totalorder %s132, %s133
    %p142 = scmp.eq.s32.totalorder %s17, 0
    %p143 = por %p141, %p142
    %p144 = scmp.ne.s32.totalorder %s132, %s133
    %p145 = scmp.eq.s32.totalorder %s18, 1
    %p146 = por %p144, %p145
    %p148 = scmp.ne.s32.totalorder %s133, %s147
    %p149 = scmp.eq.s32.totalorder %s18, 0
    %p150 = por %p148, %p149
    %s151 = ssub.s32 %s12, %s19
    %p152 = scmp.eq.s32.totalorder %s151, 0
    %s154 = sadd.s32 %s153, 1
    %s155 = scalar_select %p152, %s153, %s154
    %p158 = pneg %p152
    %p159 = scmp.eq.s32.totalorder %s12, 1
    %p160 = por %p158, %p159
    %p161 = scmp.ne.s32.totalorder %s153, %s156
    %p162 = scmp.eq.s32.totalorder %s12, 0
    %p163 = por %p161, %p162
    %p164 = scmp.ne.s32.totalorder %s153, %s156
    %p165 = scmp.eq.s32.totalorder %s17, 1
    %p166 = por %p164, %p165
    %p167 = scmp.ne.s32.totalorder %s156, %s157
    %p168 = scmp.eq.s32.totalorder %s17, 0
    %p169 = por %p167, %p168
    %p170 = scmp.ne.s32.totalorder %s156, %s157
    %p171 = scmp.eq.s32.totalorder %s18, 1
    %p172 = por %p170, %p171
    %p174 = scmp.ne.s32.totalorder %s157, %s173
    %p175 = scmp.eq.s32.totalorder %s18, 0
    %p176 = por %p174, %p175
    %p177 = scmp.le.s32.totalorder 1, %s12
    %p178 = scmp.lt.s32.totalorder %s12, 3
    %p179 = pnand %p177, %p178
    %p180 = pneg %p179
    // Predicated region
    $region9: #{ref_double_conv.1} parent=5 // pred_check
      _
    $region10: #{ref_double_conv.1} parent=5 // pred_check_branch
      %182 = sbr.rel (%p179) target = $region12
    $region11: #{ref_double_conv.1} parent=5 // pred_region
      %s183 = ssub.s32 %s12, 1
      // Predicated region
      $region13: #{ref_double_conv.1} parent=11 // pred_check
        %p184 = pneg %p59
      $region14: #{ref_double_conv.1} parent=11 // pred_check_branch
        %186 = sbr.rel (%p184) target = $region16
      $region15: #{ref_double_conv.1} parent=11 // pred_region
        _
      $region16: #{ref_double_conv.1} parent=11 // pred_fallthru
        _
      // Predicated region
      $region17: #{ref_double_conv.1} parent=11 // pred_check
        %p187 = pneg %p80
      $region18: #{ref_double_conv.1} parent=11 // pred_check_branch
        %189 = sbr.rel (%p187) target = $region20
      $region19: #{ref_double_conv.1} parent=11 // pred_region
        _
      $region20: #{ref_double_conv.1} parent=11 // pred_fallthru
        _
      // Predicated region
      $region21: #{ref_double_conv.1} parent=11 // pred_check
        %p190 = pneg %p101
      $region22: #{ref_double_conv.1} parent=11 // pred_check_branch
        %192 = sbr.rel (%p190) target = $region24
      $region23: #{ref_double_conv.1} parent=11 // pred_region
        _
      $region24: #{ref_double_conv.1} parent=11 // pred_fallthru
        _
      // Predicated region
      $region25: #{ref_double_conv.1} parent=11 // pred_check
        %p193 = pneg %p122
      $region26: #{ref_double_conv.1} parent=11 // pred_check_branch
        %195 = sbr.rel (%p193) target = $region28
      $region27: #{ref_double_conv.1} parent=11 // pred_region
        _
      $region28: #{ref_double_conv.1} parent=11 // pred_fallthru
        _
      // Predicated region
      $region29: #{ref_double_conv.1} parent=11 // pred_check
        %p196 = pneg %p143
      $region30: #{ref_double_conv.1} parent=11 // pred_check_branch
        %198 = sbr.rel (%p196) target = $region32
      $region31: #{ref_double_conv.1} parent=11 // pred_region
        _
      $region32: #{ref_double_conv.1} parent=11 // pred_fallthru
        _
    $region12: #{ref_double_conv.1} parent=5 // pred_fallthru
      _
    %p199 = scmp.lt.s32.totalorder %s12, 2
    // Predicated region
    $region33: #{ref_double_conv.1} parent=5 // pred_check
      %p200 = pneg %p199
    $region34: #{ref_double_conv.1} parent=5 // pred_check_branch
      %202 = sbr.rel (%p200) target = $region36
    $region35: #{ref_double_conv.1} parent=5 // pred_region
      // Predicated region
      $region37: #{ref_double_conv.1} parent=35 // pred_check
        %p203 = pneg %p32
      $region38: #{ref_double_conv.1} parent=35 // pred_check_branch
        %205 = sbr.rel (%p203) target = $region40
      $region39: #{ref_double_conv.1} parent=35 // pred_region
        %s206 = smul.u32 3, %s12
        %p207 = scmp.lt.s32.totalorder %s206, 5
        %s208 = scalar_select %p207, %s206, 5
        %s209 = smul.addr %s208, 8
        %s210 = scalar_lea.vmem %s0, %s209
        %s211 = smul.u32 3, %s12
      $region40: #{ref_double_conv.1} parent=35 // pred_fallthru
        _
    $region36: #{ref_double_conv.1} parent=5 // pred_fallthru
      _
    %p212 = scmp.le.s32.totalorder 1, %s12
    %p213 = scmp.lt.s32.totalorder %s12, 3
    %p214 = pnand %p212, %p213
    %p215 = pneg %p214
    // Predicated region
    $region41: #{ref_double_conv.1} parent=5 // pred_check
      _
    $region42: #{ref_double_conv.1} parent=5 // pred_check_branch
      %217 = sbr.rel (%p214) target = $region44
    $region43: #{ref_double_conv.1} parent=5 // pred_region
      %s218 = ssub.s32 %s12, 1
      %s219 = smul.u32 3, %s17
      %p220 = scmp.lt.s32.totalorder %s219, 5
      %s221 = scalar_select %p220, %s219, 5
      %s222 = smul.addr %s221, 8
      %s223 = scalar_lea.vmem %s0, %s222
      %p224 = pneg %p38
      %p225 = pneg %p35
      %p226 = pneg %p59
      %p227 = pneg %p56
      %p228 = pneg %p80
      %p229 = pneg %p77
      %p230 = pneg %p101
      %p231 = pneg %p98
      %p232 = pneg %p122
      %p233 = pneg %p119
      %p234 = pneg %p143
      %p235 = pneg %p140
      %p236 = pneg %p169
      %p237 = pneg %p166
      %s238 = smul.u32 3, %s17
      %p239 = scmp.lt.s32.totalorder %s238, 5
      %s240 = scalar_select %p239, %s238, 5
      %s241 = smul.addr %s240, 8
      %s242 = scalar_lea.vmem %s6, %s241
      %s243 = smul.u32 3, %s17
      %p244 = scmp.lt.s32.totalorder %s243, 5
      %s245 = scalar_select %p244, %s243, 5
      %s246 = smul.addr %s245, 8
      %s247 = scalar_lea.vmem %s0, %s246
      %s248 = smul.u32 3, %s17
      %s249 = smul.u32 3, %s17
      %p250 = scmp.lt.s32.totalorder %s249, 5
      %s251 = scalar_select %p250, %s249, 5
      %s252 = smul.addr %s251, 8
      %s253 = scalar_lea.vmem %s6, %s252
      %s254 = smul.u32 3, %s17
      %v255 = vld [vmem:[%s247] sm:$0xff]
      %v256 = vld [vmem:[%s247 + $0x8] sm:$0xff]
      %v257 = vld [vmem:[%s247 + $0x10] sm:$0xff]
      %258 = vrot.lane.b32.xlu0 %v255, 19
      %v259 = vpop.permute.xlu0 %258
      %260 = vrot.lane.b32.xlu0 %v256, 19
      %v261 = vpop.permute.xlu0 %260
      %262 = vrot.lane.b32.xlu0 %v257, 19
      %v263 = vpop.permute.xlu0 %262
      %v264 = vlaneseq
      %v265 = vand.u32 %v264, 127
      %vm266 = vcmp.lt.s32.totalorder %v265, 19
      %v267 = vsel %vm266, %v261, %v263
      %v268 = vsel %vm266, %v259, %v261
      %v269 = vsel %vm266, %v263, %v259
      %270 = vrot.lane.b32.xlu0 %v255, 18
      %v271 = vpop.permute.xlu0 %270
      %272 = vrot.lane.b32.xlu0 %v256, 18
      %v273 = vpop.permute.xlu0 %272
      %274 = vrot.lane.b32.xlu0 %v257, 18
      %v275 = vpop.permute.xlu0 %274
      %vm276 = vcmp.lt.s32.totalorder %v265, 18
      %v277 = vsel %vm276, %v273, %v275
      %v278 = vsel %vm276, %v271, %v273
      %v279 = vsel %vm276, %v275, %v271
      %280 = vrot.lane.b32.xlu0 %v255, 17
      %v281 = vpop.permute.xlu0 %280
      %282 = vrot.lane.b32.xlu0 %v256, 17
      %v283 = vpop.permute.xlu0 %282
      %284 = vrot.lane.b32.xlu0 %v257, 17
      %v285 = vpop.permute.xlu0 %284
      %vm286 = vcmp.lt.s32.totalorder %v265, 17
      %v287 = vsel %vm286, %v283, %v285
      %v288 = vsel %vm286, %v281, %v283
      %v289 = vsel %vm286, %v285, %v281
      %v290 = vld [vmem:[%s1] sm:$0xff]
      %291 = vrot.lane.b32.xlu0 %v255, 1
      %v292 = vpop.permute.xlu0 %291
      %293 = vrot.lane.b32.xlu0 %v256, 1
      %v294 = vpop.permute.xlu0 %293
      %295 = vrot.lane.b32.xlu0 %v257, 1
      %v296 = vpop.permute.xlu0 %295
      %vm297 = vcmp.lt.s32.totalorder %v265, 1
      %v298 = vsel %vm297, %v294, %v296
      %v299 = vsel %vm297, %v292, %v294
      %v300 = vsel %vm297, %v296, %v292
      %301 = vrot.lane.b32.xlu0 %v255, 127
      %v302 = vpop.permute.xlu0 %301
      %303 = vrot.lane.b32.xlu0 %v256, 127
      %v304 = vpop.permute.xlu0 %303
      %305 = vrot.lane.b32.xlu0 %v257, 127
      %v306 = vpop.permute.xlu0 %305
      %vm307 = vcmp.lt.s32.totalorder %v265, 127
      %v308 = vsel %vm307, %v304, %v306
      %v309 = vsel %vm307, %v302, %v304
      %v310 = vsel %vm307, %v306, %v302
      %s311 = scalar_lea.vmem %s1, 8
      %v312 = vld [vmem:[%s311] sm:$0xff]
      %vm313 = vcmask 195584
      %v315 = vsel %vm313, %v312, 0
      %317 = vmatprep.subr.mxu0 0.0
      %318 = vmatpush1.msra.mxu0 0.0
      %319 = vmatprep.subr.mxu0 0.0
      %320 = vmatpush1.msra.mxu0 0.0
      %321 = vmatprep.subr.mxu0 0.0
      %322 = vmatpush1.msra.mxu0 0.0
      %323 = vmatprep.subr.mxu0 0.0
      %324 = vmatpush1.msra.mxu0 0.0
      %325 = vmatprep.subr.mxu0 0.0
      %326 = vmatpush1.msra.mxu0 0.0
      %327 = vmatprep.subr.mxu0 0.0
      %328 = vmatpush1.msra.mxu0 0.0
      %329 = vmatprep.subr.mxu0 0.0
      %330 = vmatpush1.msra.mxu0 0.0
      %331 = vmatprep.subr.mxu0 0.0
      %332 = vmatpush1.msra.mxu0 0.0
      %333 = vmatprep.subr.mxu0 0.0
      %334 = vmatpush1.msra.mxu0 0.0
      %335 = vmatprep.subr.mxu0 0.0
      %336 = vmatpush1.msra.mxu0 0.0
      %337 = vmatprep.subr.mxu0 0.0
      %338 = vmatpush1.msra.mxu0 0.0
      %339 = vmatprep.subr.mxu0 0.0
      %340 = vmatpush1.msra.mxu0 0.0
      %341 = vmatprep.subr.mxu0 0.0
      %342 = vmatpush1.msra.mxu0 0.0
      %343 = vmatprep.subr.mxu0 %v308
      %344 = vmatpush1.msra.mxu0 %v309
      %345 = vmatprep.subr.mxu0 %v256
      %346 = vmatpush1.msra.mxu0 %v255
      %347 = vmatprep.subr.mxu0 %v299
      %348 = vmatpush1.msra.mxu0 %v300
      %349 = vmatprep.subr.mxu0 0.0
      %350 = vmatpush2.msra.mxu0 0.0
      %351 = vmatprep.subr.mxu0 0.0
      %352 = vmatpush2.msra.mxu0 0.0
      %353 = vmatprep.subr.mxu0 0.0
      %354 = vmatpush2.msra.mxu0 0.0
      %355 = vmatprep.subr.mxu0 0.0
      %356 = vmatpush2.msra.mxu0 0.0
      %357 = vmatprep.subr.mxu0 0.0
      %358 = vmatpush2.msra.mxu0 0.0
      %359 = vmatprep.subr.mxu0 0.0
      %360 = vmatpush2.msra.mxu0 0.0
      %361 = vmatprep.subr.mxu0 0.0
      %362 = vmatpush2.msra.mxu0 0.0
      %363 = vmatprep.subr.mxu0 0.0
      %364 = vmatpush2.msra.mxu0 0.0
      %365 = vmatprep.subr.mxu0 0.0
      %366 = vmatpush2.msra.mxu0 0.0
      %367 = vmatprep.subr.mxu0 0.0
      %368 = vmatpush2.msra.mxu0 0.0
      %369 = vmatprep.subr.mxu0 0.0
      %370 = vmatpush2.msra.mxu0 0.0
      %371 = vmatprep.subr.mxu0 0.0
      %372 = vmatpush2.msra.mxu0 0.0
      %373 = vmatprep.subr.mxu0 0.0
      %374 = vmatpush2.msra.mxu0 0.0
      %375 = vmatprep.subr.mxu0 0.0
      %376 = vmatpush2.msra.mxu0 0.0
      %377 = vmatprep.subr.mxu0 0.0
      %378 = vmatpush2.msra.mxu0 0.0
      %379 = vmatprep.subr.mxu0 0.0
      %380 = vmatpush2.msra.mxu0 0.0
      %381 = vmatprep.mubr.f32.mxu0 0.0
      %382 = vmatmul.mubr.f32.gmra.mxu0 %v315
      %v383 = vpop.f32.mrf.mxu0
      %v384 = vadd.f32 0.0, %v383
      %v385 = vpop.f32.mrf.mxu0
      %v386 = vadd.f32 0.0, %v385
      %387 = vdwg.mxu0
      %388 = vmatprep.subr.mxu0 0.0
      %389 = vmatpush1.msra.mxu0 0.0
      %390 = vmatprep.subr.mxu0 0.0
      %391 = vmatpush1.msra.mxu0 0.0
      %392 = vmatprep.subr.mxu0 0.0
      %393 = vmatpush1.msra.mxu0 0.0
      %394 = vmatprep.subr.mxu0 0.0
      %395 = vmatpush1.msra.mxu0 0.0
      %396 = vmatprep.subr.mxu0 0.0
      %397 = vmatpush1.msra.mxu0 0.0
      %398 = vmatprep.subr.mxu0 0.0
      %399 = vmatpush1.msra.mxu0 0.0
      %400 = vmatprep.subr.mxu0 0.0
      %401 = vmatpush1.msra.mxu0 0.0
      %402 = vmatprep.subr.mxu0 0.0
      %403 = vmatpush1.msra.mxu0 0.0
      %404 = vmatprep.subr.mxu0 0.0
      %405 = vmatpush1.msra.mxu0 0.0
      %406 = vmatprep.subr.mxu0 0.0
      %407 = vmatpush1.msra.mxu0 0.0
      %408 = vmatprep.subr.mxu0 0.0
      %409 = vmatpush1.msra.mxu0 0.0
      %410 = vmatprep.subr.mxu0 0.0
      %411 = vmatpush1.msra.mxu0 0.0
      %412 = vmatprep.subr.mxu0 0.0
      %413 = vmatpush1.msra.mxu0 0.0
      %414 = vmatprep.subr.mxu0 0.0
      %415 = vmatpush1.msra.mxu0 %v310
      %416 = vmatprep.subr.mxu0 0.0
      %417 = vmatpush1.msra.mxu0 %v257
      %418 = vmatprep.subr.mxu0 0.0
      %419 = vmatpush1.msra.mxu0 %v298
      %420 = vmatprep.subr.mxu0 0.0
      %421 = vmatpush2.msra.mxu0 0.0
      %422 = vmatprep.subr.mxu0 0.0
      %423 = vmatpush2.msra.mxu0 0.0
      %424 = vmatprep.subr.mxu0 0.0
      %425 = vmatpush2.msra.mxu0 0.0
      %426 = vmatprep.subr.mxu0 0.0
      %427 = vmatpush2.msra.mxu0 0.0
      %428 = vmatprep.subr.mxu0 0.0
      %429 = vmatpush2.msra.mxu0 0.0
      %430 = vmatprep.subr.mxu0 0.0
      %431 = vmatpush2.msra.mxu0 0.0
      %432 = vmatprep.subr.mxu0 0.0
      %433 = vmatpush2.msra.mxu0 0.0
      %434 = vmatprep.subr.mxu0 0.0
      %435 = vmatpush2.msra.mxu0 0.0
      %436 = vmatprep.subr.mxu0 0.0
      %437 = vmatpush2.msra.mxu0 0.0
      %438 = vmatprep.subr.mxu0 0.0
      %439 = vmatpush2.msra.mxu0 0.0
      %440 = vmatprep.subr.mxu0 0.0
      %441 = vmatpush2.msra.mxu0 0.0
      %442 = vmatprep.subr.mxu0 0.0
      %443 = vmatpush2.msra.mxu0 0.0
      %444 = vmatprep.subr.mxu0 0.0
      %445 = vmatpush2.msra.mxu0 0.0
      %446 = vmatprep.subr.mxu0 0.0
      %447 = vmatpush2.msra.mxu0 0.0
      %448 = vmatprep.subr.mxu0 0.0
      %449 = vmatpush2.msra.mxu0 0.0
      %450 = vmatprep.subr.mxu0 0.0
      %451 = vmatpush2.msra.mxu0 0.0
      %452 = vmatprep.mubr.f32.mxu0 0.0
      %453 = vmatmul.mubr.f32.gmra.mxu0 %v315
      %v454 = vpop.f32.mrf.mxu0
      %v455 = vadd.f32 0.0, %v454
      %v456 = vpop.f32.mrf.mxu0
      %457 = vdwg.mxu0
      %v459 = vsel %vm313, %v290, 0
      %461 = vmatprep.subr.mxu0 0.0
      %462 = vmatpush1.msra.mxu0 0.0
      %463 = vmatprep.subr.mxu0 0.0
      %464 = vmatpush1.msra.mxu0 0.0
      %465 = vmatprep.subr.mxu0 0.0
      %466 = vmatpush1.msra.mxu0 0.0
      %467 = vmatprep.subr.mxu0 0.0
      %468 = vmatpush1.msra.mxu0 0.0
      %469 = vmatprep.subr.mxu0 0.0
      %470 = vmatpush1.msra.mxu0 0.0
      %471 = vmatprep.subr.mxu0 0.0
      %472 = vmatpush1.msra.mxu0 0.0
      %473 = vmatprep.subr.mxu0 0.0
      %474 = vmatpush1.msra.mxu0 0.0
      %475 = vmatprep.subr.mxu0 0.0
      %476 = vmatpush1.msra.mxu0 0.0
      %477 = vmatprep.subr.mxu0 0.0
      %478 = vmatpush1.msra.mxu0 0.0
      %479 = vmatprep.subr.mxu0 0.0
      %480 = vmatpush1.msra.mxu0 0.0
      %481 = vmatprep.subr.mxu0 0.0
      %482 = vmatpush1.msra.mxu0 0.0
      %483 = vmatprep.subr.mxu0 0.0
      %484 = vmatpush1.msra.mxu0 0.0
      %485 = vmatprep.subr.mxu0 0.0
      %486 = vmatpush1.msra.mxu0 0.0
      %487 = vmatprep.subr.mxu0 %v288
      %488 = vmatpush1.msra.mxu0 %v289
      %489 = vmatprep.subr.mxu0 %v278
      %490 = vmatpush1.msra.mxu0 %v279
      %491 = vmatprep.subr.mxu0 %v268
      %492 = vmatpush1.msra.mxu0 %v269
      %493 = vmatprep.subr.mxu0 0.0
      %494 = vmatpush2.msra.mxu0 0.0
      %495 = vmatprep.subr.mxu0 0.0
      %496 = vmatpush2.msra.mxu0 0.0
      %497 = vmatprep.subr.mxu0 0.0
      %498 = vmatpush2.msra.mxu0 0.0
      %499 = vmatprep.subr.mxu0 0.0
      %500 = vmatpush2.msra.mxu0 0.0
      %501 = vmatprep.subr.mxu0 0.0
      %502 = vmatpush2.msra.mxu0 0.0
      %503 = vmatprep.subr.mxu0 0.0
      %504 = vmatpush2.msra.mxu0 0.0
      %505 = vmatprep.subr.mxu0 0.0
      %506 = vmatpush2.msra.mxu0 0.0
      %507 = vmatprep.subr.mxu0 0.0
      %508 = vmatpush2.msra.mxu0 0.0
      %509 = vmatprep.subr.mxu0 0.0
      %510 = vmatpush2.msra.mxu0 0.0
      %511 = vmatprep.subr.mxu0 0.0
      %512 = vmatpush2.msra.mxu0 0.0
      %513 = vmatprep.subr.mxu0 0.0
      %514 = vmatpush2.msra.mxu0 0.0
      %515 = vmatprep.subr.mxu0 0.0
      %516 = vmatpush2.msra.mxu0 0.0
      %517 = vmatprep.subr.mxu0 0.0
      %518 = vmatpush2.msra.mxu0 0.0
      %519 = vmatprep.subr.mxu0 0.0
      %520 = vmatpush2.msra.mxu0 0.0
      %521 = vmatprep.subr.mxu0 0.0
      %522 = vmatpush2.msra.mxu0 0.0
      %523 = vmatprep.subr.mxu0 0.0
      %524 = vmatpush2.msra.mxu0 0.0
      %525 = vmatprep.mubr.f32.mxu0 0.0
      %526 = vmatmul.mubr.f32.gmra.mxu0 %v459
      %v527 = vpop.f32.mrf.mxu0
      %v528 = vadd.f32 %v384, %v527
      %v529 = vpop.f32.mrf.mxu0
      %v530 = vadd.f32 %v386, %v529
      %531 = vdwg.mxu0
      %532 = vmatprep.subr.mxu0 0.0
      %533 = vmatpush1.msra.mxu0 0.0
      %534 = vmatprep.subr.mxu0 0.0
      %535 = vmatpush1.msra.mxu0 0.0
      %536 = vmatprep.subr.mxu0 0.0
      %537 = vmatpush1.msra.mxu0 0.0
      %538 = vmatprep.subr.mxu0 0.0
      %539 = vmatpush1.msra.mxu0 0.0
      %540 = vmatprep.subr.mxu0 0.0
      %541 = vmatpush1.msra.mxu0 0.0
      %542 = vmatprep.subr.mxu0 0.0
      %543 = vmatpush1.msra.mxu0 0.0
      %544 = vmatprep.subr.mxu0 0.0
      %545 = vmatpush1.msra.mxu0 0.0
      %546 = vmatprep.subr.mxu0 0.0
      %547 = vmatpush1.msra.mxu0 0.0
      %548 = vmatprep.subr.mxu0 0.0
      %549 = vmatpush1.msra.mxu0 0.0
      %550 = vmatprep.subr.mxu0 0.0
      %551 = vmatpush1.msra.mxu0 0.0
      %552 = vmatprep.subr.mxu0 0.0
      %553 = vmatpush1.msra.mxu0 0.0
      %554 = vmatprep.subr.mxu0 0.0
      %555 = vmatpush1.msra.mxu0 0.0
      %556 = vmatprep.subr.mxu0 0.0
      %557 = vmatpush1.msra.mxu0 0.0
      %558 = vmatprep.subr.mxu0 0.0
      %559 = vmatpush1.msra.mxu0 %v287
      %560 = vmatprep.subr.mxu0 0.0
      %561 = vmatpush1.msra.mxu0 %v277
      %562 = vmatprep.subr.mxu0 0.0
      %563 = vmatpush1.msra.mxu0 %v267
      %564 = vmatprep.subr.mxu0 0.0
      %565 = vmatpush2.msra.mxu0 0.0
      %566 = vmatprep.subr.mxu0 0.0
      %567 = vmatpush2.msra.mxu0 0.0
      %568 = vmatprep.subr.mxu0 0.0
      %569 = vmatpush2.msra.mxu0 0.0
      %570 = vmatprep.subr.mxu0 0.0
      %571 = vmatpush2.msra.mxu0 0.0
      %572 = vmatprep.subr.mxu0 0.0
      %573 = vmatpush2.msra.mxu0 0.0
      %574 = vmatprep.subr.mxu0 0.0
      %575 = vmatpush2.msra.mxu0 0.0
      %576 = vmatprep.subr.mxu0 0.0
      %577 = vmatpush2.msra.mxu0 0.0
      %578 = vmatprep.subr.mxu0 0.0
      %579 = vmatpush2.msra.mxu0 0.0
      %580 = vmatprep.subr.mxu0 0.0
      %581 = vmatpush2.msra.mxu0 0.0
      %582 = vmatprep.subr.mxu0 0.0
      %583 = vmatpush2.msra.mxu0 0.0
      %584 = vmatprep.subr.mxu0 0.0
      %585 = vmatpush2.msra.mxu0 0.0
      %586 = vmatprep.subr.mxu0 0.0
      %587 = vmatpush2.msra.mxu0 0.0
      %588 = vmatprep.subr.mxu0 0.0
      %589 = vmatpush2.msra.mxu0 0.0
      %590 = vmatprep.subr.mxu0 0.0
      %591 = vmatpush2.msra.mxu0 0.0
      %592 = vmatprep.subr.mxu0 0.0
      %593 = vmatpush2.msra.mxu0 0.0
      %594 = vmatprep.subr.mxu0 0.0
      %595 = vmatpush2.msra.mxu0 0.0
      %596 = vmatprep.mubr.f32.mxu0 0.0
      %597 = vmatmul.mubr.f32.gmra.mxu0 %v459
      %v598 = vpop.f32.mrf.mxu0
      %v599 = vadd.f32 %v455, %v598
      %v600 = vpop.f32.mrf.mxu0
      %601 = vdwg.mxu0
      %602 = vrot.lane.b32.xlu0 %v255, 111
      %v603 = vpop.permute.xlu0 %602
      %604 = vrot.lane.b32.xlu0 %v256, 111
      %v605 = vpop.permute.xlu0 %604
      %606 = vrot.lane.b32.xlu0 %v257, 111
      %v607 = vpop.permute.xlu0 %606
      %vm608 = vcmp.lt.s32.totalorder %v265, 111
      %v609 = vsel %vm608, %v605, %v607
      %v610 = vsel %vm608, %v603, %v605
      %v611 = vsel %vm608, %v607, %v603
      %612 = vrot.lane.b32.xlu0 %v255, 110
      %v613 = vpop.permute.xlu0 %612
      %614 = vrot.lane.b32.xlu0 %v256, 110
      %v615 = vpop.permute.xlu0 %614
      %616 = vrot.lane.b32.xlu0 %v257, 110
      %v617 = vpop.permute.xlu0 %616
      %vm618 = vcmp.lt.s32.totalorder %v265, 110
      %v619 = vsel %vm618, %v615, %v617
      %v620 = vsel %vm618, %v613, %v615
      %v621 = vsel %vm618, %v617, %v613
      %622 = vrot.lane.b32.xlu0 %v255, 109
      %v623 = vpop.permute.xlu0 %622
      %624 = vrot.lane.b32.xlu0 %v256, 109
      %v625 = vpop.permute.xlu0 %624
      %626 = vrot.lane.b32.xlu0 %v257, 109
      %v627 = vpop.permute.xlu0 %626
      %vm628 = vcmp.lt.s32.totalorder %v265, 109
      %v629 = vsel %vm628, %v625, %v627
      %v630 = vsel %vm628, %v623, %v625
      %v631 = vsel %vm628, %v627, %v623
      %s632 = scalar_lea.vmem %s1, 16
      %v633 = vld [vmem:[%s632] sm:$0xff]
      %v635 = vsel %vm313, %v633, 0
      %637 = vmatprep.subr.mxu0 0.0
      %638 = vmatpush1.msra.mxu0 0.0
      %639 = vmatprep.subr.mxu0 0.0
      %640 = vmatpush1.msra.mxu0 0.0
      %641 = vmatprep.subr.mxu0 0.0
      %642 = vmatpush1.msra.mxu0 0.0
      %643 = vmatprep.subr.mxu0 0.0
      %644 = vmatpush1.msra.mxu0 0.0
      %645 = vmatprep.subr.mxu0 0.0
      %646 = vmatpush1.msra.mxu0 0.0
      %647 = vmatprep.subr.mxu0 0.0
      %648 = vmatpush1.msra.mxu0 0.0
      %649 = vmatprep.subr.mxu0 0.0
      %650 = vmatpush1.msra.mxu0 0.0
      %651 = vmatprep.subr.mxu0 0.0
      %652 = vmatpush1.msra.mxu0 0.0
      %653 = vmatprep.subr.mxu0 0.0
      %654 = vmatpush1.msra.mxu0 0.0
      %655 = vmatprep.subr.mxu0 0.0
      %656 = vmatpush1.msra.mxu0 0.0
      %657 = vmatprep.subr.mxu0 0.0
      %658 = vmatpush1.msra.mxu0 0.0
      %659 = vmatprep.subr.mxu0 0.0
      %660 = vmatpush1.msra.mxu0 0.0
      %661 = vmatprep.subr.mxu0 0.0
      %662 = vmatpush1.msra.mxu0 0.0
      %663 = vmatprep.subr.mxu0 %v629
      %664 = vmatpush1.msra.mxu0 %v630
      %665 = vmatprep.subr.mxu0 %v619
      %666 = vmatpush1.msra.mxu0 %v620
      %667 = vmatprep.subr.mxu0 %v609
      %668 = vmatpush1.msra.mxu0 %v610
      %669 = vmatprep.subr.mxu0 0.0
      %670 = vmatpush2.msra.mxu0 0.0
      %671 = vmatprep.subr.mxu0 0.0
      %672 = vmatpush2.msra.mxu0 0.0
      %673 = vmatprep.subr.mxu0 0.0
      %674 = vmatpush2.msra.mxu0 0.0
      %675 = vmatprep.subr.mxu0 0.0
      %676 = vmatpush2.msra.mxu0 0.0
      %677 = vmatprep.subr.mxu0 0.0
      %678 = vmatpush2.msra.mxu0 0.0
      %679 = vmatprep.subr.mxu0 0.0
      %680 = vmatpush2.msra.mxu0 0.0
      %681 = vmatprep.subr.mxu0 0.0
      %682 = vmatpush2.msra.mxu0 0.0
      %683 = vmatprep.subr.mxu0 0.0
      %684 = vmatpush2.msra.mxu0 0.0
      %685 = vmatprep.subr.mxu0 0.0
      %686 = vmatpush2.msra.mxu0 0.0
      %687 = vmatprep.subr.mxu0 0.0
      %688 = vmatpush2.msra.mxu0 0.0
      %689 = vmatprep.subr.mxu0 0.0
      %690 = vmatpush2.msra.mxu0 0.0
      %691 = vmatprep.subr.mxu0 0.0
      %692 = vmatpush2.msra.mxu0 0.0
      %693 = vmatprep.subr.mxu0 0.0
      %694 = vmatpush2.msra.mxu0 0.0
      %695 = vmatprep.subr.mxu0 0.0
      %696 = vmatpush2.msra.mxu0 0.0
      %697 = vmatprep.subr.mxu0 0.0
      %698 = vmatpush2.msra.mxu0 0.0
      %699 = vmatprep.subr.mxu0 0.0
      %700 = vmatpush2.msra.mxu0 0.0
      %701 = vmatprep.mubr.f32.mxu0 0.0
      %702 = vmatmul.mubr.f32.gmra.mxu0 %v635
      %v703 = vpop.f32.mrf.mxu0
      %v704 = vadd.f32 0.0, %v703
      %v705 = vpop.f32.mrf.mxu0
      %v706 = vadd.f32 0.0, %v705
      %707 = vdwg.mxu0
      %708 = vmatprep.subr.mxu0 0.0
      %709 = vmatpush1.msra.mxu0 0.0
      %710 = vmatprep.subr.mxu0 0.0
      %711 = vmatpush1.msra.mxu0 0.0
      %712 = vmatprep.subr.mxu0 0.0
      %713 = vmatpush1.msra.mxu0 0.0
      %714 = vmatprep.subr.mxu0 0.0
      %715 = vmatpush1.msra.mxu0 0.0
      %716 = vmatprep.subr.mxu0 0.0
      %717 = vmatpush1.msra.mxu0 0.0
      %718 = vmatprep.subr.mxu0 0.0
      %719 = vmatpush1.msra.mxu0 0.0
      %720 = vmatprep.subr.mxu0 0.0
      %721 = vmatpush1.msra.mxu0 0.0
      %722 = vmatprep.subr.mxu0 0.0
      %723 = vmatpush1.msra.mxu0 0.0
      %724 = vmatprep.subr.mxu0 0.0
      %725 = vmatpush1.msra.mxu0 0.0
      %726 = vmatprep.subr.mxu0 0.0
      %727 = vmatpush1.msra.mxu0 0.0
      %728 = vmatprep.subr.mxu0 0.0
      %729 = vmatpush1.msra.mxu0 0.0
      %730 = vmatprep.subr.mxu0 0.0
      %731 = vmatpush1.msra.mxu0 0.0
      %732 = vmatprep.subr.mxu0 0.0
      %733 = vmatpush1.msra.mxu0 0.0
      %734 = vmatprep.subr.mxu0 0.0
      %735 = vmatpush1.msra.mxu0 %v631
      %736 = vmatprep.subr.mxu0 0.0
      %737 = vmatpush1.msra.mxu0 %v621
      %738 = vmatprep.subr.mxu0 0.0
      %739 = vmatpush1.msra.mxu0 %v611
      %740 = vmatprep.subr.mxu0 0.0
      %741 = vmatpush2.msra.mxu0 0.0
      %742 = vmatprep.subr.mxu0 0.0
      %743 = vmatpush2.msra.mxu0 0.0
      %744 = vmatprep.subr.mxu0 0.0
      %745 = vmatpush2.msra.mxu0 0.0
      %746 = vmatprep.subr.mxu0 0.0
      %747 = vmatpush2.msra.mxu0 0.0
      %748 = vmatprep.subr.mxu0 0.0
      %749 = vmatpush2.msra.mxu0 0.0
      %750 = vmatprep.subr.mxu0 0.0
      %751 = vmatpush2.msra.mxu0 0.0
      %752 = vmatprep.subr.mxu0 0.0
      %753 = vmatpush2.msra.mxu0 0.0
      %754 = vmatprep.subr.mxu0 0.0
      %755 = vmatpush2.msra.mxu0 0.0
      %756 = vmatprep.subr.mxu0 0.0
      %757 = vmatpush2.msra.mxu0 0.0
      %758 = vmatprep.subr.mxu0 0.0
      %759 = vmatpush2.msra.mxu0 0.0
      %760 = vmatprep.subr.mxu0 0.0
      %761 = vmatpush2.msra.mxu0 0.0
      %762 = vmatprep.subr.mxu0 0.0
      %763 = vmatpush2.msra.mxu0 0.0
      %764 = vmatprep.subr.mxu0 0.0
      %765 = vmatpush2.msra.mxu0 0.0
      %766 = vmatprep.subr.mxu0 0.0
      %767 = vmatpush2.msra.mxu0 0.0
      %768 = vmatprep.subr.mxu0 0.0
      %769 = vmatpush2.msra.mxu0 0.0
      %770 = vmatprep.subr.mxu0 0.0
      %771 = vmatpush2.msra.mxu0 0.0
      %772 = vmatprep.mubr.f32.mxu0 0.0
      %773 = vmatmul.mubr.f32.gmra.mxu0 %v635
      %v774 = vpop.f32.mrf.mxu0
      %v775 = vadd.f32 0.0, %v774
      %v776 = vpop.f32.mrf.mxu0
      %777 = vdwg.mxu0
      %v778 = vadd.f32 %v528, %v704
      %v779 = vadd.f32 %v530, %v706
      %v780 = vadd.f32 %v599, %v775
      %v781 = vld [vmem:[%s2] sm:$0xff]
      %783 = vset.pattern.permute.xlu0 0
      %784 = vperm.xlu0 %783, %v781
      %v785 = vpop.permute.xlu0 %784
      %v787 = vadd.f32 %v778, %v785
      %v788 = vadd.f32 %v779, %v785
      %v789 = vadd.f32 %v780, %v785
      %v790 = vmax.f32 %v787, 0.0
      %v791 = vmax.f32 %v788, 0.0
      %v792 = vmax.f32 %v789, 0.0
      %v793 = vld [vmem:[%s5] sm:$0x7]
      %v795 = vlaneseq
      %v796 = vshrl.u32 %v795, 7
      %v797 = vsub.s32 0, %v796
      %v798 = vrot.slane %v793, %v797
      %v799 = vlaneseq
      %v800 = vshrl.u32 %v799, 7
      %v801 = vsub.s32 1, %v800
      %v802 = vrot.slane %v793, %v801
      %v803 = vlaneseq
      %v804 = vshrl.u32 %v803, 7
      %v805 = vsub.s32 2, %v804
      %v806 = vrot.slane %v793, %v805
      %v810 = vmul.f32 %v790, %v798
      %v811 = vmul.f32 %v791, %v802
      %v812 = vmul.f32 %v792, %v806
      %813 = vrot.lane.b32.xlu0 %v810, 19
      %v814 = vpop.permute.xlu0 %813
      %815 = vrot.lane.b32.xlu0 %v811, 19
      %v816 = vpop.permute.xlu0 %815
      %817 = vrot.lane.b32.xlu0 %v812, 19
      %v818 = vpop.permute.xlu0 %817
      %v819 = vsel %vm266, %v816, %v818
      %v820 = vsel %vm266, %v814, %v816
      %v821 = vsel %vm266, %v818, %v814
      %822 = vrot.lane.b32.xlu0 %v810, 18
      %v823 = vpop.permute.xlu0 %822
      %824 = vrot.lane.b32.xlu0 %v811, 18
      %v825 = vpop.permute.xlu0 %824
      %826 = vrot.lane.b32.xlu0 %v812, 18
      %v827 = vpop.permute.xlu0 %826
      %v828 = vsel %vm276, %v825, %v827
      %v829 = vsel %vm276, %v823, %v825
      %v830 = vsel %vm276, %v827, %v823
      %831 = vrot.lane.b32.xlu0 %v810, 17
      %v832 = vpop.permute.xlu0 %831
      %833 = vrot.lane.b32.xlu0 %v811, 17
      %v834 = vpop.permute.xlu0 %833
      %835 = vrot.lane.b32.xlu0 %v812, 17
      %v836 = vpop.permute.xlu0 %835
      %v837 = vsel %vm286, %v834, %v836
      %v838 = vsel %vm286, %v832, %v834
      %v839 = vsel %vm286, %v836, %v832
      %v840 = vld [vmem:[%s3] sm:$0xff]
      %841 = vrot.lane.b32.xlu0 %v810, 1
      %v842 = vpop.permute.xlu0 %841
      %843 = vrot.lane.b32.xlu0 %v811, 1
      %v844 = vpop.permute.xlu0 %843
      %845 = vrot.lane.b32.xlu0 %v812, 1
      %v846 = vpop.permute.xlu0 %845
      %v847 = vsel %vm297, %v844, %v846
      %v848 = vsel %vm297, %v842, %v844
      %v849 = vsel %vm297, %v846, %v842
      %850 = vrot.lane.b32.xlu0 %v810, 127
      %v851 = vpop.permute.xlu0 %850
      %852 = vrot.lane.b32.xlu0 %v811, 127
      %v853 = vpop.permute.xlu0 %852
      %854 = vrot.lane.b32.xlu0 %v812, 127
      %v855 = vpop.permute.xlu0 %854
      %v856 = vsel %vm307, %v853, %v855
      %v857 = vsel %vm307, %v851, %v853
      %v858 = vsel %vm307, %v855, %v851
      %s859 = scalar_lea.vmem %s3, 8
      %v860 = vld [vmem:[%s859] sm:$0xff]
      %v862 = vsel %vm313, %v860, 0
      %864 = vmatprep.subr.mxu0 0.0
      %865 = vmatpush1.msra.mxu0 0.0
      %866 = vmatprep.subr.mxu0 0.0
      %867 = vmatpush1.msra.mxu0 0.0
      %868 = vmatprep.subr.mxu0 0.0
      %869 = vmatpush1.msra.mxu0 0.0
      %870 = vmatprep.subr.mxu0 0.0
      %871 = vmatpush1.msra.mxu0 0.0
      %872 = vmatprep.subr.mxu0 0.0
      %873 = vmatpush1.msra.mxu0 0.0
      %874 = vmatprep.subr.mxu0 0.0
      %875 = vmatpush1.msra.mxu0 0.0
      %876 = vmatprep.subr.mxu0 0.0
      %877 = vmatpush1.msra.mxu0 0.0
      %878 = vmatprep.subr.mxu0 0.0
      %879 = vmatpush1.msra.mxu0 0.0
      %880 = vmatprep.subr.mxu0 0.0
      %881 = vmatpush1.msra.mxu0 0.0
      %882 = vmatprep.subr.mxu0 0.0
      %883 = vmatpush1.msra.mxu0 0.0
      %884 = vmatprep.subr.mxu0 0.0
      %885 = vmatpush1.msra.mxu0 0.0
      %886 = vmatprep.subr.mxu0 0.0
      %887 = vmatpush1.msra.mxu0 0.0
      %888 = vmatprep.subr.mxu0 0.0
      %889 = vmatpush1.msra.mxu0 0.0
      %890 = vmatprep.subr.mxu0 %v856
      %891 = vmatpush1.msra.mxu0 %v857
      %892 = vmatprep.subr.mxu0 %v811
      %893 = vmatpush1.msra.mxu0 %v810
      %894 = vmatprep.subr.mxu0 %v848
      %895 = vmatpush1.msra.mxu0 %v849
      %896 = vmatprep.subr.mxu0 0.0
      %897 = vmatpush2.msra.mxu0 0.0
      %898 = vmatprep.subr.mxu0 0.0
      %899 = vmatpush2.msra.mxu0 0.0
      %900 = vmatprep.subr.mxu0 0.0
      %901 = vmatpush2.msra.mxu0 0.0
      %902 = vmatprep.subr.mxu0 0.0
      %903 = vmatpush2.msra.mxu0 0.0
      %904 = vmatprep.subr.mxu0 0.0
      %905 = vmatpush2.msra.mxu0 0.0
      %906 = vmatprep.subr.mxu0 0.0
      %907 = vmatpush2.msra.mxu0 0.0
      %908 = vmatprep.subr.mxu0 0.0
      %909 = vmatpush2.msra.mxu0 0.0
      %910 = vmatprep.subr.mxu0 0.0
      %911 = vmatpush2.msra.mxu0 0.0
      %912 = vmatprep.subr.mxu0 0.0
      %913 = vmatpush2.msra.mxu0 0.0
      %914 = vmatprep.subr.mxu0 0.0
      %915 = vmatpush2.msra.mxu0 0.0
      %916 = vmatprep.subr.mxu0 0.0
      %917 = vmatpush2.msra.mxu0 0.0
      %918 = vmatprep.subr.mxu0 0.0
      %919 = vmatpush2.msra.mxu0 0.0
      %920 = vmatprep.subr.mxu0 0.0
      %921 = vmatpush2.msra.mxu0 0.0
      %922 = vmatprep.subr.mxu0 0.0
      %923 = vmatpush2.msra.mxu0 0.0
      %924 = vmatprep.subr.mxu0 0.0
      %925 = vmatpush2.msra.mxu0 0.0
      %926 = vmatprep.subr.mxu0 0.0
      %927 = vmatpush2.msra.mxu0 0.0
      %928 = vmatprep.mubr.f32.mxu0 0.0
      %929 = vmatmul.mubr.f32.gmra.mxu0 %v862
      %v930 = vpop.f32.mrf.mxu0
      %v931 = vadd.f32 0.0, %v930
      %v932 = vpop.f32.mrf.mxu0
      %v933 = vadd.f32 0.0, %v932
      %934 = vdwg.mxu0
      %935 = vmatprep.subr.mxu0 0.0
      %936 = vmatpush1.msra.mxu0 0.0
      %937 = vmatprep.subr.mxu0 0.0
      %938 = vmatpush1.msra.mxu0 0.0
      %939 = vmatprep.subr.mxu0 0.0
      %940 = vmatpush1.msra.mxu0 0.0
      %941 = vmatprep.subr.mxu0 0.0
      %942 = vmatpush1.msra.mxu0 0.0
      %943 = vmatprep.subr.mxu0 0.0
      %944 = vmatpush1.msra.mxu0 0.0
      %945 = vmatprep.subr.mxu0 0.0
      %946 = vmatpush1.msra.mxu0 0.0
      %947 = vmatprep.subr.mxu0 0.0
      %948 = vmatpush1.msra.mxu0 0.0
      %949 = vmatprep.subr.mxu0 0.0
      %950 = vmatpush1.msra.mxu0 0.0
      %951 = vmatprep.subr.mxu0 0.0
      %952 = vmatpush1.msra.mxu0 0.0
      %953 = vmatprep.subr.mxu0 0.0
      %954 = vmatpush1.msra.mxu0 0.0
      %955 = vmatprep.subr.mxu0 0.0
      %956 = vmatpush1.msra.mxu0 0.0
      %957 = vmatprep.subr.mxu0 0.0
      %958 = vmatpush1.msra.mxu0 0.0
      %959 = vmatprep.subr.mxu0 0.0
      %960 = vmatpush1.msra.mxu0 0.0
      %961 = vmatprep.subr.mxu0 0.0
      %962 = vmatpush1.msra.mxu0 %v858
      %963 = vmatprep.subr.mxu0 0.0
      %964 = vmatpush1.msra.mxu0 %v812
      %965 = vmatprep.subr.mxu0 0.0
      %966 = vmatpush1.msra.mxu0 %v847
      %967 = vmatprep.subr.mxu0 0.0
      %968 = vmatpush2.msra.mxu0 0.0
      %969 = vmatprep.subr.mxu0 0.0
      %970 = vmatpush2.msra.mxu0 0.0
      %971 = vmatprep.subr.mxu0 0.0
      %972 = vmatpush2.msra.mxu0 0.0
      %973 = vmatprep.subr.mxu0 0.0
      %974 = vmatpush2.msra.mxu0 0.0
      %975 = vmatprep.subr.mxu0 0.0
      %976 = vmatpush2.msra.mxu0 0.0
      %977 = vmatprep.subr.mxu0 0.0
      %978 = vmatpush2.msra.mxu0 0.0
      %979 = vmatprep.subr.mxu0 0.0
      %980 = vmatpush2.msra.mxu0 0.0
      %981 = vmatprep.subr.mxu0 0.0
      %982 = vmatpush2.msra.mxu0 0.0
      %983 = vmatprep.subr.mxu0 0.0
      %984 = vmatpush2.msra.mxu0 0.0
      %985 = vmatprep.subr.mxu0 0.0
      %986 = vmatpush2.msra.mxu0 0.0
      %987 = vmatprep.subr.mxu0 0.0
      %988 = vmatpush2.msra.mxu0 0.0
      %989 = vmatprep.subr.mxu0 0.0
      %990 = vmatpush2.msra.mxu0 0.0
      %991 = vmatprep.subr.mxu0 0.0
      %992 = vmatpush2.msra.mxu0 0.0
      %993 = vmatprep.subr.mxu0 0.0
      %994 = vmatpush2.msra.mxu0 0.0
      %995 = vmatprep.subr.mxu0 0.0
      %996 = vmatpush2.msra.mxu0 0.0
      %997 = vmatprep.subr.mxu0 0.0
      %998 = vmatpush2.msra.mxu0 0.0
      %999 = vmatprep.mubr.f32.mxu0 0.0
      %1000 = vmatmul.mubr.f32.gmra.mxu0 %v862
      %v1001 = vpop.f32.mrf.mxu0
      %v1002 = vadd.f32 0.0, %v1001
      %v1003 = vpop.f32.mrf.mxu0
      %1004 = vdwg.mxu0
      %v1006 = vsel %vm313, %v840, 0
      %1008 = vmatprep.subr.mxu0 0.0
      %1009 = vmatpush1.msra.mxu0 0.0
      %1010 = vmatprep.subr.mxu0 0.0
      %1011 = vmatpush1.msra.mxu0 0.0
      %1012 = vmatprep.subr.mxu0 0.0
      %1013 = vmatpush1.msra.mxu0 0.0
      %1014 = vmatprep.subr.mxu0 0.0
      %1015 = vmatpush1.msra.mxu0 0.0
      %1016 = vmatprep.subr.mxu0 0.0
      %1017 = vmatpush1.msra.mxu0 0.0
      %1018 = vmatprep.subr.mxu0 0.0
      %1019 = vmatpush1.msra.mxu0 0.0
      %1020 = vmatprep.subr.mxu0 0.0
      %1021 = vmatpush1.msra.mxu0 0.0
      %1022 = vmatprep.subr.mxu0 0.0
      %1023 = vmatpush1.msra.mxu0 0.0
      %1024 = vmatprep.subr.mxu0 0.0
      %1025 = vmatpush1.msra.mxu0 0.0
      %1026 = vmatprep.subr.mxu0 0.0
      %1027 = vmatpush1.msra.mxu0 0.0
      %1028 = vmatprep.subr.mxu0 0.0
      %1029 = vmatpush1.msra.mxu0 0.0
      %1030 = vmatprep.subr.mxu0 0.0
      %1031 = vmatpush1.msra.mxu0 0.0
      %1032 = vmatprep.subr.mxu0 0.0
      %1033 = vmatpush1.msra.mxu0 0.0
      %1034 = vmatprep.subr.mxu0 %v838
      %1035 = vmatpush1.msra.mxu0 %v839
      %1036 = vmatprep.subr.mxu0 %v829
      %1037 = vmatpush1.msra.mxu0 %v830
      %1038 = vmatprep.subr.mxu0 %v820
      %1039 = vmatpush1.msra.mxu0 %v821
      %1040 = vmatprep.subr.mxu0 0.0
      %1041 = vmatpush2.msra.mxu0 0.0
      %1042 = vmatprep.subr.mxu0 0.0
      %1043 = vmatpush2.msra.mxu0 0.0
      %1044 = vmatprep.subr.mxu0 0.0
      %1045 = vmatpush2.msra.mxu0 0.0
      %1046 = vmatprep.subr.mxu0 0.0
      %1047 = vmatpush2.msra.mxu0 0.0
      %1048 = vmatprep.subr.mxu0 0.0
      %1049 = vmatpush2.msra.mxu0 0.0
      %1050 = vmatprep.subr.mxu0 0.0
      %1051 = vmatpush2.msra.mxu0 0.0
      %1052 = vmatprep.subr.mxu0 0.0
      %1053 = vmatpush2.msra.mxu0 0.0
      %1054 = vmatprep.subr.mxu0 0.0
      %1055 = vmatpush2.msra.mxu0 0.0
      %1056 = vmatprep.subr.mxu0 0.0
      %1057 = vmatpush2.msra.mxu0 0.0
      %1058 = vmatprep.subr.mxu0 0.0
      %1059 = vmatpush2.msra.mxu0 0.0
      %1060 = vmatprep.subr.mxu0 0.0
      %1061 = vmatpush2.msra.mxu0 0.0
      %1062 = vmatprep.subr.mxu0 0.0
      %1063 = vmatpush2.msra.mxu0 0.0
      %1064 = vmatprep.subr.mxu0 0.0
      %1065 = vmatpush2.msra.mxu0 0.0
      %1066 = vmatprep.subr.mxu0 0.0
      %1067 = vmatpush2.msra.mxu0 0.0
      %1068 = vmatprep.subr.mxu0 0.0
      %1069 = vmatpush2.msra.mxu0 0.0
      %1070 = vmatprep.subr.mxu0 0.0
      %1071 = vmatpush2.msra.mxu0 0.0
      %1072 = vmatprep.mubr.f32.mxu0 0.0
      %1073 = vmatmul.mubr.f32.gmra.mxu0 %v1006
      %v1074 = vpop.f32.mrf.mxu0
      %v1075 = vadd.f32 %v931, %v1074
      %v1076 = vpop.f32.mrf.mxu0
      %v1077 = vadd.f32 %v933, %v1076
      %1078 = vdwg.mxu0
      %1079 = vmatprep.subr.mxu0 0.0
      %1080 = vmatpush1.msra.mxu0 0.0
      %1081 = vmatprep.subr.mxu0 0.0
      %1082 = vmatpush1.msra.mxu0 0.0
      %1083 = vmatprep.subr.mxu0 0.0
      %1084 = vmatpush1.msra.mxu0 0.0
      %1085 = vmatprep.subr.mxu0 0.0
      %1086 = vmatpush1.msra.mxu0 0.0
      %1087 = vmatprep.subr.mxu0 0.0
      %1088 = vmatpush1.msra.mxu0 0.0
      %1089 = vmatprep.subr.mxu0 0.0
      %1090 = vmatpush1.msra.mxu0 0.0
      %1091 = vmatprep.subr.mxu0 0.0
      %1092 = vmatpush1.msra.mxu0 0.0
      %1093 = vmatprep.subr.mxu0 0.0
      %1094 = vmatpush1.msra.mxu0 0.0
      %1095 = vmatprep.subr.mxu0 0.0
      %1096 = vmatpush1.msra.mxu0 0.0
      %1097 = vmatprep.subr.mxu0 0.0
      %1098 = vmatpush1.msra.mxu0 0.0
      %1099 = vmatprep.subr.mxu0 0.0
      %1100 = vmatpush1.msra.mxu0 0.0
      %1101 = vmatprep.subr.mxu0 0.0
      %1102 = vmatpush1.msra.mxu0 0.0
      %1103 = vmatprep.subr.mxu0 0.0
      %1104 = vmatpush1.msra.mxu0 0.0
      %1105 = vmatprep.subr.mxu0 0.0
      %1106 = vmatpush1.msra.mxu0 %v837
      %1107 = vmatprep.subr.mxu0 0.0
      %1108 = vmatpush1.msra.mxu0 %v828
      %1109 = vmatprep.subr.mxu0 0.0
      %1110 = vmatpush1.msra.mxu0 %v819
      %1111 = vmatprep.subr.mxu0 0.0
      %1112 = vmatpush2.msra.mxu0 0.0
      %1113 = vmatprep.subr.mxu0 0.0
      %1114 = vmatpush2.msra.mxu0 0.0
      %1115 = vmatprep.subr.mxu0 0.0
      %1116 = vmatpush2.msra.mxu0 0.0
      %1117 = vmatprep.subr.mxu0 0.0
      %1118 = vmatpush2.msra.mxu0 0.0
      %1119 = vmatprep.subr.mxu0 0.0
      %1120 = vmatpush2.msra.mxu0 0.0
      %1121 = vmatprep.subr.mxu0 0.0
      %1122 = vmatpush2.msra.mxu0 0.0
      %1123 = vmatprep.subr.mxu0 0.0
      %1124 = vmatpush2.msra.mxu0 0.0
      %1125 = vmatprep.subr.mxu0 0.0
      %1126 = vmatpush2.msra.mxu0 0.0
      %1127 = vmatprep.subr.mxu0 0.0
      %1128 = vmatpush2.msra.mxu0 0.0
      %1129 = vmatprep.subr.mxu0 0.0
      %1130 = vmatpush2.msra.mxu0 0.0
      %1131 = vmatprep.subr.mxu0 0.0
      %1132 = vmatpush2.msra.mxu0 0.0
      %1133 = vmatprep.subr.mxu0 0.0
      %1134 = vmatpush2.msra.mxu0 0.0
      %1135 = vmatprep.subr.mxu0 0.0
      %1136 = vmatpush2.msra.mxu0 0.0
      %1137 = vmatprep.subr.mxu0 0.0
      %1138 = vmatpush2.msra.mxu0 0.0
      %1139 = vmatprep.subr.mxu0 0.0
      %1140 = vmatpush2.msra.mxu0 0.0
      %1141 = vmatprep.subr.mxu0 0.0
      %1142 = vmatpush2.msra.mxu0 0.0
      %1143 = vmatprep.mubr.f32.mxu0 0.0
      %1144 = vmatmul.mubr.f32.gmra.mxu0 %v1006
      %v1145 = vpop.f32.mrf.mxu0
      %v1146 = vadd.f32 %v1002, %v1145
      %v1147 = vpop.f32.mrf.mxu0
      %1148 = vdwg.mxu0
      %1149 = vrot.lane.b32.xlu0 %v810, 111
      %v1150 = vpop.permute.xlu0 %1149
      %1151 = vrot.lane.b32.xlu0 %v811, 111
      %v1152 = vpop.permute.xlu0 %1151
      %1153 = vrot.lane.b32.xlu0 %v812, 111
      %v1154 = vpop.permute.xlu0 %1153
      %v1155 = vsel %vm608, %v1152, %v1154
      %v1156 = vsel %vm608, %v1150, %v1152
      %v1157 = vsel %vm608, %v1154, %v1150
      %1158 = vrot.lane.b32.xlu0 %v810, 110
      %v1159 = vpop.permute.xlu0 %1158
      %1160 = vrot.lane.b32.xlu0 %v811, 110
      %v1161 = vpop.permute.xlu0 %1160
      %1162 = vrot.lane.b32.xlu0 %v812, 110
      %v1163 = vpop.permute.xlu0 %1162
      %v1164 = vsel %vm618, %v1161, %v1163
      %v1165 = vsel %vm618, %v1159, %v1161
      %v1166 = vsel %vm618, %v1163, %v1159
      %1167 = vrot.lane.b32.xlu0 %v810, 109
      %v1168 = vpop.permute.xlu0 %1167
      %1169 = vrot.lane.b32.xlu0 %v811, 109
      %v1170 = vpop.permute.xlu0 %1169
      %1171 = vrot.lane.b32.xlu0 %v812, 109
      %v1172 = vpop.permute.xlu0 %1171
      %v1173 = vsel %vm628, %v1170, %v1172
      %v1174 = vsel %vm628, %v1168, %v1170
      %v1175 = vsel %vm628, %v1172, %v1168
      %s1176 = scalar_lea.vmem %s3, 16
      %v1177 = vld [vmem:[%s1176] sm:$0xff]
      %v1179 = vsel %vm313, %v1177, 0
      %1181 = vmatprep.subr.mxu0 0.0
      %1182 = vmatpush1.msra.mxu0 0.0
      %1183 = vmatprep.subr.mxu0 0.0
      %1184 = vmatpush1.msra.mxu0 0.0
      %1185 = vmatprep.subr.mxu0 0.0
      %1186 = vmatpush1.msra.mxu0 0.0
      %1187 = vmatprep.subr.mxu0 0.0
      %1188 = vmatpush1.msra.mxu0 0.0
      %1189 = vmatprep.subr.mxu0 0.0
      %1190 = vmatpush1.msra.mxu0 0.0
      %1191 = vmatprep.subr.mxu0 0.0
      %1192 = vmatpush1.msra.mxu0 0.0
      %1193 = vmatprep.subr.mxu0 0.0
      %1194 = vmatpush1.msra.mxu0 0.0
      %1195 = vmatprep.subr.mxu0 0.0
      %1196 = vmatpush1.msra.mxu0 0.0
      %1197 = vmatprep.subr.mxu0 0.0
      %1198 = vmatpush1.msra.mxu0 0.0
      %1199 = vmatprep.subr.mxu0 0.0
      %1200 = vmatpush1.msra.mxu0 0.0
      %1201 = vmatprep.subr.mxu0 0.0
      %1202 = vmatpush1.msra.mxu0 0.0
      %1203 = vmatprep.subr.mxu0 0.0
      %1204 = vmatpush1.msra.mxu0 0.0
      %1205 = vmatprep.subr.mxu0 0.0
      %1206 = vmatpush1.msra.mxu0 0.0
      %1207 = vmatprep.subr.mxu0 %v1173
      %1208 = vmatpush1.msra.mxu0 %v1174
      %1209 = vmatprep.subr.mxu0 %v1164
      %1210 = vmatpush1.msra.mxu0 %v1165
      %1211 = vmatprep.subr.mxu0 %v1155
      %1212 = vmatpush1.msra.mxu0 %v1156
      %1213 = vmatprep.subr.mxu0 0.0
      %1214 = vmatpush2.msra.mxu0 0.0
      %1215 = vmatprep.subr.mxu0 0.0
      %1216 = vmatpush2.msra.mxu0 0.0
      %1217 = vmatprep.subr.mxu0 0.0
      %1218 = vmatpush2.msra.mxu0 0.0
      %1219 = vmatprep.subr.mxu0 0.0
      %1220 = vmatpush2.msra.mxu0 0.0
      %1221 = vmatprep.subr.mxu0 0.0
      %1222 = vmatpush2.msra.mxu0 0.0
      %1223 = vmatprep.subr.mxu0 0.0
      %1224 = vmatpush2.msra.mxu0 0.0
      %1225 = vmatprep.subr.mxu0 0.0
      %1226 = vmatpush2.msra.mxu0 0.0
      %1227 = vmatprep.subr.mxu0 0.0
      %1228 = vmatpush2.msra.mxu0 0.0
      %1229 = vmatprep.subr.mxu0 0.0
      %1230 = vmatpush2.msra.mxu0 0.0
      %1231 = vmatprep.subr.mxu0 0.0
      %1232 = vmatpush2.msra.mxu0 0.0
      %1233 = vmatprep.subr.mxu0 0.0
      %1234 = vmatpush2.msra.mxu0 0.0
      %1235 = vmatprep.subr.mxu0 0.0
      %1236 = vmatpush2.msra.mxu0 0.0
      %1237 = vmatprep.subr.mxu0 0.0
      %1238 = vmatpush2.msra.mxu0 0.0
      %1239 = vmatprep.subr.mxu0 0.0
      %1240 = vmatpush2.msra.mxu0 0.0
      %1241 = vmatprep.subr.mxu0 0.0
      %1242 = vmatpush2.msra.mxu0 0.0
      %1243 = vmatprep.subr.mxu0 0.0
      %1244 = vmatpush2.msra.mxu0 0.0
      %1245 = vmatprep.mubr.f32.mxu0 0.0
      %1246 = vmatmul.mubr.f32.gmra.mxu0 %v1179
      %v1247 = vpop.f32.mrf.mxu0
      %v1248 = vadd.f32 0.0, %v1247
      %v1249 = vpop.f32.mrf.mxu0
      %v1250 = vadd.f32 0.0, %v1249
      %1251 = vdwg.mxu0
      %1252 = vmatprep.subr.mxu0 0.0
      %1253 = vmatpush1.msra.mxu0 0.0
      %1254 = vmatprep.subr.mxu0 0.0
      %1255 = vmatpush1.msra.mxu0 0.0
      %1256 = vmatprep.subr.mxu0 0.0
      %1257 = vmatpush1.msra.mxu0 0.0
      %1258 = vmatprep.subr.mxu0 0.0
      %1259 = vmatpush1.msra.mxu0 0.0
      %1260 = vmatprep.subr.mxu0 0.0
      %1261 = vmatpush1.msra.mxu0 0.0
      %1262 = vmatprep.subr.mxu0 0.0
      %1263 = vmatpush1.msra.mxu0 0.0
      %1264 = vmatprep.subr.mxu0 0.0
      %1265 = vmatpush1.msra.mxu0 0.0
      %1266 = vmatprep.subr.mxu0 0.0
      %1267 = vmatpush1.msra.mxu0 0.0
      %1268 = vmatprep.subr.mxu0 0.0
      %1269 = vmatpush1.msra.mxu0 0.0
      %1270 = vmatprep.subr.mxu0 0.0
      %1271 = vmatpush1.msra.mxu0 0.0
      %1272 = vmatprep.subr.mxu0 0.0
      %1273 = vmatpush1.msra.mxu0 0.0
      %1274 = vmatprep.subr.mxu0 0.0
      %1275 = vmatpush1.msra.mxu0 0.0
      %1276 = vmatprep.subr.mxu0 0.0
      %1277 = vmatpush1.msra.mxu0 0.0
      %1278 = vmatprep.subr.mxu0 0.0
      %1279 = vmatpush1.msra.mxu0 %v1175
      %1280 = vmatprep.subr.mxu0 0.0
      %1281 = vmatpush1.msra.mxu0 %v1166
      %1282 = vmatprep.subr.mxu0 0.0
      %1283 = vmatpush1.msra.mxu0 %v1157
      %1284 = vmatprep.subr.mxu0 0.0
      %1285 = vmatpush2.msra.mxu0 0.0
      %1286 = vmatprep.subr.mxu0 0.0
      %1287 = vmatpush2.msra.mxu0 0.0
      %1288 = vmatprep.subr.mxu0 0.0
      %1289 = vmatpush2.msra.mxu0 0.0
      %1290 = vmatprep.subr.mxu0 0.0
      %1291 = vmatpush2.msra.mxu0 0.0
      %1292 = vmatprep.subr.mxu0 0.0
      %1293 = vmatpush2.msra.mxu0 0.0
      %1294 = vmatprep.subr.mxu0 0.0
      %1295 = vmatpush2.msra.mxu0 0.0
      %1296 = vmatprep.subr.mxu0 0.0
      %1297 = vmatpush2.msra.mxu0 0.0
      %1298 = vmatprep.subr.mxu0 0.0
      %1299 = vmatpush2.msra.mxu0 0.0
      %1300 = vmatprep.subr.mxu0 0.0
      %1301 = vmatpush2.msra.mxu0 0.0
      %1302 = vmatprep.subr.mxu0 0.0
      %1303 = vmatpush2.msra.mxu0 0.0
      %1304 = vmatprep.subr.mxu0 0.0
      %1305 = vmatpush2.msra.mxu0 0.0
      %1306 = vmatprep.subr.mxu0 0.0
      %1307 = vmatpush2.msra.mxu0 0.0
      %1308 = vmatprep.subr.mxu0 0.0
      %1309 = vmatpush2.msra.mxu0 0.0
      %1310 = vmatprep.subr.mxu0 0.0
      %1311 = vmatpush2.msra.mxu0 0.0
      %1312 = vmatprep.subr.mxu0 0.0
      %1313 = vmatpush2.msra.mxu0 0.0
      %1314 = vmatprep.subr.mxu0 0.0
      %1315 = vmatpush2.msra.mxu0 0.0
      %1316 = vmatprep.mubr.f32.mxu0 0.0
      %1317 = vmatmul.mubr.f32.gmra.mxu0 %v1179
      %v1318 = vpop.f32.mrf.mxu0
      %v1319 = vadd.f32 0.0, %v1318
      %v1320 = vpop.f32.mrf.mxu0
      %1321 = vdwg.mxu0
      %v1322 = vadd.f32 %v1075, %v1248
      %v1323 = vadd.f32 %v1077, %v1250
      %v1324 = vadd.f32 %v1146, %v1319
      %v1325 = vld [vmem:[%s4] sm:$0xff]
      %1327 = vset.pattern.permute.xlu0 0
      %1328 = vperm.xlu0 %1327, %v1325
      %v1329 = vpop.permute.xlu0 %1328
      %v1331 = vadd.f32 %v1322, %v1329
      %v1332 = vadd.f32 %v1323, %v1329
      %v1333 = vadd.f32 %v1324, %v1329
      %v1334 = vmax.f32 %v1331, 0.0
      %v1335 = vmax.f32 %v1332, 0.0
      %v1336 = vmax.f32 %v1333, 0.0
      %1337 = vst [vmem:[%s253] sm:$0xff] %v1334
      %1338 = vst [vmem:[%s253 + $0x8] sm:$0xff] %v1335
      %1339 = vst [vmem:[%s253 + $0x10] sm:$0xff] %v1336
      %s1340 = smul.u32 3, %s17
      %p1341 = scmp.lt.s32.totalorder %s1340, 5
      %s1342 = scalar_select %p1341, %s1340, 5
      %s1343 = smul.addr %s1342, 8
      %s1344 = scalar_lea.vmem %s6, %s1343
      // Predicated region
      $region45: #{ref_double_conv.1} parent=43 // pred_check
        %p1345 = pneg %p166
      $region46: #{ref_double_conv.1} parent=43 // pred_check_branch
        %1347 = sbr.rel (%p1345) target = $region48
      $region47: #{ref_double_conv.1} parent=43 // pred_region
        %s1348 = smul.u32 3, %s17
      $region48: #{ref_double_conv.1} parent=43 // pred_fallthru
        _
    $region44: #{ref_double_conv.1} parent=5 // pred_fallthru
      _
    %p1349 = scmp.le.s32.totalorder 2, %s12
    // Predicated region
    $region49: #{ref_double_conv.1} parent=5 // pred_check
      %p1350 = pneg %p1349
    $region50: #{ref_double_conv.1} parent=5 // pred_check_branch
      %1352 = sbr.rel (%p1350) target = $region52
    $region51: #{ref_double_conv.1} parent=5 // pred_region
      %s1353 = ssub.s32 %s12, 2
      // Predicated region
      $region53: #{ref_double_conv.1} parent=51 // pred_check
        %p1354 = pneg %p172
      $region54: #{ref_double_conv.1} parent=51 // pred_check_branch
        %1356 = sbr.rel (%p1354) target = $region56
      $region55: #{ref_double_conv.1} parent=51 // pred_region
        %s1357 = smul.u32 3, %s18
        %p1358 = scmp.lt.s32.totalorder %s1357, 5
        %s1359 = scalar_select %p1358, %s1357, 5
        %s1360 = smul.addr %s1359, 8
        %s1361 = scalar_lea.vmem %s6, %s1360
      $region56: #{ref_double_conv.1} parent=51 // pred_fallthru
        _
    $region52: #{ref_double_conv.1} parent=5 // pred_fallthru
      _
  $region6: #{ref_double_conv.1} parent=0 // loop_footer
    %s16 = sadd.s32 1, %s12
  $region7: #{ref_double_conv.1} parent=0 // loop_footer_branch
    %11 = sbr.rel target = $region3
  $region8: #{ref_double_conv.1} parent=0 // loop_exit
    _

</llo_original>
